<compile_context>
chip_gen: v7x
topology: tpu7x:2x2x1
jax: 0.10.0
libtpu: 0.0.40
codegen_flags: <defaults>
</compile_context>

<pallas_src>
import functools

import jax
import jax.numpy as jnp
from jax.experimental import pallas as pl
from jax.experimental.pallas import tpu as pltpu


def _round_up(x, m):
    return (x + m - 1) // m * m


def _pick_tn(fused_dim, n_out, budget_bytes=4 << 20):
    """Largest multiple of 128 that divides n_out and keeps one bf16 w3 slab
    ([fused_dim, tn]) under `budget_bytes` (conservative for v5e/v7x VMEM)."""
    cap = max(128, (budget_bytes // (fused_dim * 2)) // 128 * 128)
    tn = max(128, (min(n_out, cap) // 128) * 128)
    while n_out % tn:
        tn -= 128
    return max(tn, 128)


def _mlp_kernel(img_ref, txt_ref,
                wi_ref, bi_ref, wt_ref, bt_ref,
                w1i_ref, w1t_ref, b1_ref, w2_ref, b2_ref,
                w3_ref, b3_ref,
                out_ref, h_ref):
    n = pl.program_id(1)

    # h depends only on the batch tile (grid axis 0): compute it once per batch
    # tile (on the first w3 N-slab) and cache it in VMEM scratch while w3/b3
    # slabs stream across the sequential ("arbitrary") grid axis 1.
    @pl.when(n == 0)
    def _():
        img_p = jnp.dot(img_ref[...], wi_ref[...],
                        preferred_element_type=jnp.float32) + bi_ref[...]
        txt_p = jnp.dot(txt_ref[...], wt_ref[...],
                        preferred_element_type=jnp.float32) + bt_ref[...]
        # concat([img_p, txt_p]) @ w1  ==  img_p @ w1[:F] + txt_p @ w1[F:]
        h = (jnp.dot(img_p.astype(jnp.bfloat16), w1i_ref[...],
                     preferred_element_type=jnp.float32)
             + jnp.dot(txt_p.astype(jnp.bfloat16), w1t_ref[...],
                       preferred_element_type=jnp.float32)
             + b1_ref[...])
        h = jnp.maximum(h, 0.0)
        h = jnp.dot(h.astype(jnp.bfloat16), w2_ref[...],
                    preferred_element_type=jnp.float32) + b2_ref[...]
        h = jnp.maximum(h, 0.0)
        h_ref[...] = h.astype(jnp.bfloat16)

    out = jnp.dot(h_ref[...], w3_ref[...],
                  preferred_element_type=jnp.float32) + b3_ref[...]
    out_ref[...] = out.astype(out_ref.dtype)


@functools.partial(jax.jit,
                   static_argnames=("num_header", "fused_dim", "bm", "tn"))
def mlp_forward(image_feat, text_feat, params, *, num_header, fused_dim,
                bm=None, tn=None):
    """image_feat: [B, T_img, image_dim]; text_feat: [B, T_txt, text_dim]."""
    B = image_feat.shape[0]
    image_dim = params["wi"].shape[0]
    text_dim = params["wt"].shape[0]
    n_out = fused_dim * num_header
    assert n_out % 128 == 0, "fused_dim * num_header must be a multiple of 128"

    # Mean-pool over time in the wrapper (XLA); kernel only sees [B, D] reps.
    img_repr = jnp.mean(image_feat.astype(jnp.float32), axis=1)
    txt_repr = jnp.mean(text_feat.astype(jnp.float32), axis=1)

    # Pad batch so the matmul M dim is sublane-aligned (>= 8).
    if bm is None:
        bm = min(_round_up(B, 8), 256)
    b_pad = _round_up(B, bm)
    if b_pad != B:
        img_repr = jnp.pad(img_repr, ((0, b_pad - B), (0, 0)))
        txt_repr = jnp.pad(txt_repr, ((0, b_pad - B), (0, 0)))

    if tn is None:
        tn = _pick_tn(fused_dim, n_out)

    bf16, f32 = jnp.bfloat16, jnp.float32
    w1 = params["w1"]
    args = (
        img_repr.astype(bf16), txt_repr.astype(bf16),
        params["wi"].astype(bf16), params["bi"].astype(f32),
        params["wt"].astype(bf16), params["bt"].astype(f32),
        w1[:fused_dim].astype(bf16), w1[fused_dim:].astype(bf16),
        params["b1"].astype(f32),
        params["w2"].astype(bf16), params["b2"].astype(f32),
        params["w3"].astype(bf16), params["b3"].astype(f32),
    )

    const = lambda i, n: (0, 0)
    in_specs = [
        pl.BlockSpec((bm, image_dim), lambda i, n: (i, 0)),      # img_repr
        pl.BlockSpec((bm, text_dim), lambda i, n: (i, 0)),       # txt_repr
        pl.BlockSpec((image_dim, fused_dim), const),             # wi
        pl.BlockSpec((1, fused_dim), const),                     # bi
        pl.BlockSpec((text_dim, fused_dim), const),              # wt
        pl.BlockSpec((1, fused_dim), const),                     # bt
        pl.BlockSpec((fused_dim, fused_dim), const),             # w1_img
        pl.BlockSpec((fused_dim, fused_dim), const),             # w1_txt
        pl.BlockSpec((1, fused_dim), const),                     # b1
        pl.BlockSpec((fused_dim, fused_dim), const),             # w2
        pl.BlockSpec((1, fused_dim), const),                     # b2
        pl.BlockSpec((fused_dim, tn), lambda i, n: (0, n)),      # w3 (streamed)
        pl.BlockSpec((1, tn), lambda i, n: (0, n)),              # b3 (streamed)
    ]

    out = pl.pallas_call(
        _mlp_kernel,
        out_shape=jax.ShapeDtypeStruct((b_pad, n_out), jnp.float32),
        grid_spec=pltpu.PrefetchScalarGridSpec(
            num_scalar_prefetch=0,
            grid=(b_pad // bm, n_out // tn),
            in_specs=in_specs,
            out_specs=pl.BlockSpec((bm, tn), lambda i, n: (i, n)),
            scratch_shapes=[pltpu.VMEM((bm, fused_dim), jnp.bfloat16)],
        ),
        compiler_params=pltpu.CompilerParams(
            # Batch tiles independent (megacore on v7x); w3 N-slabs sequential
            # so the h scratch computed at n == 0 stays valid across the axis.
            dimension_semantics=("parallel", "arbitrary")),
    )(*args)

    return out[:B].reshape(B, num_header, fused_dim)


def init_params(key, image_dim, text_dim, fused_dim):
    ks = jax.random.split(key, 10)
    s = 0.02

    def lin(kw, kb, d_in, d_out):
        w = jax.random.normal(kw, (d_in, d_out), jnp.float32) * s
        b = jax.random.normal(kb, (1, d_out), jnp.float32) * s
        return w, b

    wi, bi = lin(ks[0], ks[1], image_dim, fused_dim)
    wt, bt = lin(ks[2], ks[3], text_dim, fused_dim)
    w1, b1 = lin(ks[4], ks[5], 2 * fused_dim, fused_dim)
    w2, b2 = lin(ks[6], ks[7], fused_dim, fused_dim)
    w3, b3 = lin(ks[8], ks[9], fused_dim, fused_dim * 16)
    return dict(wi=wi, bi=bi, wt=wt, bt=bt,
                w1=w1, b1=b1, w2=w2, b2=b2, w3=w3, b3=b3)


def reference_forward(image_feat, text_feat, params, num_header, fused_dim):
    img_repr = image_feat.mean(axis=1)
    txt_repr = text_feat.mean(axis=1)
    img_p = img_repr @ params["wi"] + params["bi"]
    txt_p = txt_repr @ params["wt"] + params["bt"]
    fused = jnp.concatenate([img_p, txt_p], axis=-1)
    h = jnp.maximum(fused @ params["w1"] + params["b1"], 0.0)
    h = jnp.maximum(h @ params["w2"] + params["b2"], 0.0)
    out = h @ params["w3"] + params["b3"]
    return out.reshape(-1, num_header, fused_dim)


if __name__ == "__main__":
    # Small, module-consistent shapes (scaled-down image_dim/text_dim/fused_dim).
    B, T_img, T_txt = 2, 8, 8
    image_dim, text_dim, fused_dim, num_header = 64, 256, 128, 16

    key = jax.random.PRNGKey(0)
    k_img, k_txt, k_par = jax.random.split(key, 3)

    image_feat = jax.random.normal(k_img, (B, T_img, image_dim), jnp.float32)
    text_feat = jax.random.normal(k_txt, (B, T_txt, text_dim), jnp.float32)
    params = init_params(k_par, image_dim, text_dim, fused_dim)

    # tn=512 exercises the multi-slab w3 streaming path even at these small sizes.
    out = mlp_forward(image_feat, text_feat, params,
                      num_header=num_header, fused_dim=fused_dim, tn=512)
    out = jax.block_until_ready(out)

    ref = reference_forward(image_feat, text_feat, params, num_header, fused_dim)
    assert out.shape == (B, num_header, fused_dim), out.shape
    # Tolerance loosened vs. the pure-f32 version: matmuls use bf16 inputs
    # with f32 accumulation.
    assert jnp.allclose(out, ref, atol=1e-2, rtol=2e-2), \
        float(jnp.max(jnp.abs(out - ref)))

    print("KERNEL_OK")
</pallas_src>

<mosaic_0001>
module attributes {stable_mosaic.version = 11 : i64} {
  func.func @_mlp_kernel(%arg0: i32, %arg1: i32, %arg2: memref<8x64xbf16, #tpu.memory_space<vmem>>, %arg3: memref<8x256xbf16, #tpu.memory_space<vmem>>, %arg4: memref<64x128xbf16, #tpu.memory_space<vmem>>, %arg5: memref<1x128xf32, #tpu.memory_space<vmem>>, %arg6: memref<256x128xbf16, #tpu.memory_space<vmem>>, %arg7: memref<1x128xf32, #tpu.memory_space<vmem>>, %arg8: memref<128x128xbf16, #tpu.memory_space<vmem>>, %arg9: memref<128x128xbf16, #tpu.memory_space<vmem>>, %arg10: memref<1x128xf32, #tpu.memory_space<vmem>>, %arg11: memref<128x128xbf16, #tpu.memory_space<vmem>>, %arg12: memref<1x128xf32, #tpu.memory_space<vmem>>, %arg13: memref<128x512xbf16, #tpu.memory_space<vmem>>, %arg14: memref<1x512xf32, #tpu.memory_space<vmem>>, %arg15: memref<8x512xf32, #tpu.memory_space<vmem>>, %arg16: memref<8x128xbf16, #tpu.memory_space<vmem>>) attributes {dimension_semantics = [#tpu.dimension_semantics<parallel>, #tpu.dimension_semantics<arbitrary>], iteration_bounds = array<i64: 1, 4>, scalar_prefetch = 0 : i64, scratch_operands = 1 : i64, tpu.core_type = #tpu.core_type<tc>, window_params = [{transform_indices = @transform_0, window_bounds = array<i64: 8, 64>}, {transform_indices = @transform_1, window_bounds = array<i64: 8, 256>}, {pipeline_mode = #tpu.pipeline_mode<synchronous>, transform_indices = @transform_2, window_bounds = array<i64: 64, 128>}, {pipeline_mode = #tpu.pipeline_mode<synchronous>, transform_indices = @transform_3, window_bounds = array<i64: 1, 128>}, {pipeline_mode = #tpu.pipeline_mode<synchronous>, transform_indices = @transform_4, window_bounds = array<i64: 256, 128>}, {pipeline_mode = #tpu.pipeline_mode<synchronous>, transform_indices = @transform_5, window_bounds = array<i64: 1, 128>}, {pipeline_mode = #tpu.pipeline_mode<synchronous>, transform_indices = @transform_6, window_bounds = array<i64: 128, 128>}, {pipeline_mode = #tpu.pipeline_mode<synchronous>, transform_indices = @transform_7, window_bounds = array<i64: 128, 128>}, {pipeline_mode = #tpu.pipeline_mode<synchronous>, transform_indices = @transform_8, window_bounds = array<i64: 1, 128>}, {pipeline_mode = #tpu.pipeline_mode<synchronous>, transform_indices = @transform_9, window_bounds = array<i64: 128, 128>}, {pipeline_mode = #tpu.pipeline_mode<synchronous>, transform_indices = @transform_10, window_bounds = array<i64: 1, 128>}, {transform_indices = @transform_11, window_bounds = array<i64: 128, 512>}, {transform_indices = @transform_12, window_bounds = array<i64: 1, 512>}, {transform_indices = @transform_13, window_bounds = array<i64: 8, 512>}]} {
    %c0_i32 = arith.constant 0 : i32
    %0 = arith.cmpi eq, %arg1, %c0_i32 : i32
    %1 = arith.extui %0 : i1 to i32
    %c0_i32_0 = arith.constant 0 : i32
    %2 = arith.cmpi ne, %1, %c0_i32_0 : i32
    scf.if %2 {
      %c0_8 = arith.constant 0 : index
      %c0_9 = arith.constant 0 : index
      %10 = vector.load %arg2[%c0_8, %c0_9] : memref<8x64xbf16, #tpu.memory_space<vmem>>, vector<8x64xbf16>
      %c0_10 = arith.constant 0 : index
      %c0_11 = arith.constant 0 : index
      %11 = vector.load %arg4[%c0_10, %c0_11] : memref<64x128xbf16, #tpu.memory_space<vmem>>, vector<64x128xbf16>
      %cst_12 = arith.constant dense<0.000000e+00> : vector<8x128xf32>
      %12 = tpu.matmul %10, %11, %cst_12 {dimension_numbers = #tpu.dot_dimension_numbers<[1], [0], [0], [1], [0, 0, 1, 1], [], []>} : vector<8x64xbf16>, vector<64x128xbf16>, vector<8x128xf32> -> vector<8x128xf32>
      %c0_13 = arith.constant 0 : index
      %c0_14 = arith.constant 0 : index
      %13 = vector.load %arg5[%c0_13, %c0_14] : memref<1x128xf32, #tpu.memory_space<vmem>>, vector<1x128xf32>
      %14 = vector.broadcast %13 : vector<1x128xf32> to vector<8x128xf32>
      %15 = arith.addf %12, %14 : vector<8x128xf32>
      %c0_15 = arith.constant 0 : index
      %c0_16 = arith.constant 0 : index
      %16 = vector.load %arg3[%c0_15, %c0_16] : memref<8x256xbf16, #tpu.memory_space<vmem>>, vector<8x256xbf16>
      %c0_17 = arith.constant 0 : index
      %c0_18 = arith.constant 0 : index
      %17 = vector.load %arg6[%c0_17, %c0_18] : memref<256x128xbf16, #tpu.memory_space<vmem>>, vector<256x128xbf16>
      %cst_19 = arith.constant dense<0.000000e+00> : vector<8x128xf32>
      %18 = tpu.matmul %16, %17, %cst_19 {dimension_numbers = #tpu.dot_dimension_numbers<[1], [0], [0], [1], [0, 0, 1, 1], [], []>} : vector<8x256xbf16>, vector<256x128xbf16>, vector<8x128xf32> -> vector<8x128xf32>
      %c0_20 = arith.constant 0 : index
      %c0_21 = arith.constant 0 : index
      %19 = vector.load %arg7[%c0_20, %c0_21] : memref<1x128xf32, #tpu.memory_space<vmem>>, vector<1x128xf32>
      %20 = vector.broadcast %19 : vector<1x128xf32> to vector<8x128xf32>
      %21 = arith.addf %18, %20 : vector<8x128xf32>
      %22 = arith.truncf %15 : vector<8x128xf32> to vector<8x128xbf16>
      %c0_22 = arith.constant 0 : index
      %c0_23 = arith.constant 0 : index
      %23 = vector.load %arg8[%c0_22, %c0_23] : memref<128x128xbf16, #tpu.memory_space<vmem>>, vector<128x128xbf16>
      %cst_24 = arith.constant dense<0.000000e+00> : vector<8x128xf32>
      %24 = tpu.matmul %22, %23, %cst_24 {dimension_numbers = #tpu.dot_dimension_numbers<[1], [0], [0], [1], [0, 0, 1, 1], [], []>} : vector<8x128xbf16>, vector<128x128xbf16>, vector<8x128xf32> -> vector<8x128xf32>
      %25 = arith.truncf %21 : vector<8x128xf32> to vector<8x128xbf16>
      %c0_25 = arith.constant 0 : index
      %c0_26 = arith.constant 0 : index
      %26 = vector.load %arg9[%c0_25, %c0_26] : memref<128x128xbf16, #tpu.memory_space<vmem>>, vector<128x128xbf16>
      %cst_27 = arith.constant dense<0.000000e+00> : vector<8x128xf32>
      %27 = tpu.matmul %25, %26, %cst_27 {dimension_numbers = #tpu.dot_dimension_numbers<[1], [0], [0], [1], [0, 0, 1, 1], [], []>} : vector<8x128xbf16>, vector<128x128xbf16>, vector<8x128xf32> -> vector<8x128xf32>
      %28 = arith.addf %24, %27 : vector<8x128xf32>
      %c0_28 = arith.constant 0 : index
      %c0_29 = arith.constant 0 : index
      %29 = vector.load %arg10[%c0_28, %c0_29] : memref<1x128xf32, #tpu.memory_space<vmem>>, vector<1x128xf32>
      %30 = vector.broadcast %29 : vector<1x128xf32> to vector<8x128xf32>
      %31 = arith.addf %28, %30 : vector<8x128xf32>
      %cst_30 = arith.constant 0.000000e+00 : f32
      %32 = vector.broadcast %cst_30 : f32 to vector<8x128xf32>
      %33 = arith.maximumf %31, %32 : vector<8x128xf32>
      %34 = arith.truncf %33 : vector<8x128xf32> to vector<8x128xbf16>
      %c0_31 = arith.constant 0 : index
      %c0_32 = arith.constant 0 : index
      %35 = vector.load %arg11[%c0_31, %c0_32] : memref<128x128xbf16, #tpu.memory_space<vmem>>, vector<128x128xbf16>
      %cst_33 = arith.constant dense<0.000000e+00> : vector<8x128xf32>
      %36 = tpu.matmul %34, %35, %cst_33 {dimension_numbers = #tpu.dot_dimension_numbers<[1], [0], [0], [1], [0, 0, 1, 1], [], []>} : vector<8x128xbf16>, vector<128x128xbf16>, vector<8x128xf32> -> vector<8x128xf32>
      %c0_34 = arith.constant 0 : index
      %c0_35 = arith.constant 0 : index
      %37 = vector.load %arg12[%c0_34, %c0_35] : memref<1x128xf32, #tpu.memory_space<vmem>>, vector<1x128xf32>
      %38 = vector.broadcast %37 : vector<1x128xf32> to vector<8x128xf32>
      %39 = arith.addf %36, %38 : vector<8x128xf32>
      %cst_36 = arith.constant 0.000000e+00 : f32
      %40 = vector.broadcast %cst_36 : f32 to vector<8x128xf32>
      %41 = arith.maximumf %39, %40 : vector<8x128xf32>
      %42 = arith.truncf %41 : vector<8x128xf32> to vector<8x128xbf16>
      %c0_37 = arith.constant 0 : index
      %c0_38 = arith.constant 0 : index
      %43 = vector.load %arg16[%c0_37, %c0_38] : memref<8x128xbf16, #tpu.memory_space<vmem>>, vector<8x128xbf16>
      tpu.vector_store %arg16[%c0_37, %c0_38], %42 {strides = array<i32>} : memref<8x128xbf16, #tpu.memory_space<vmem>>, vector<8x128xbf16>,
    } else {
    }
    %c0 = arith.constant 0 : index
    %c0_1 = arith.constant 0 : index
    %3 = vector.load %arg16[%c0, %c0_1] : memref<8x128xbf16, #tpu.memory_space<vmem>>, vector<8x128xbf16>
    %c0_2 = arith.constant 0 : index
    %c0_3 = arith.constant 0 : index
    %4 = vector.load %arg13[%c0_2, %c0_3] : memref<128x512xbf16, #tpu.memory_space<vmem>>, vector<128x512xbf16>
    %cst = arith.constant dense<0.000000e+00> : vector<8x512xf32>
    %5 = tpu.matmul %3, %4, %cst {dimension_numbers = #tpu.dot_dimension_numbers<[1], [0], [0], [1], [0, 0, 1, 1], [], []>} : vector<8x128xbf16>, vector<128x512xbf16>, vector<8x512xf32> -> vector<8x512xf32>
    %c0_4 = arith.constant 0 : index
    %c0_5 = arith.constant 0 : index
    %6 = vector.load %arg14[%c0_4, %c0_5] : memref<1x512xf32, #tpu.memory_space<vmem>>, vector<1x512xf32>
    %7 = vector.broadcast %6 : vector<1x512xf32> to vector<8x512xf32>
    %8 = arith.addf %5, %7 : vector<8x512xf32>
    %c0_6 = arith.constant 0 : index
    %c0_7 = arith.constant 0 : index
    %9 = vector.load %arg15[%c0_6, %c0_7] : memref<8x512xf32, #tpu.memory_space<vmem>>, vector<8x512xf32>
    tpu.vector_store %arg15[%c0_6, %c0_7], %8 {strides = array<i32>} : memref<8x512xf32, #tpu.memory_space<vmem>>, vector<8x512xf32>,
    return
  }
  func.func @transform_0(%arg0: i32, %arg1: i32) -> (i32, i32) {
    %c0_i32 = arith.constant 0 : i32
    %c0_i32_0 = arith.constant 0 : i32
    return %arg0, %c0_i32 : i32, i32
  }
  func.func @transform_1(%arg0: i32, %arg1: i32) -> (i32, i32) {
    %c0_i32 = arith.constant 0 : i32
    %c0_i32_0 = arith.constant 0 : i32
    return %arg0, %c0_i32 : i32, i32
  }
  func.func @transform_2(%arg0: i32, %arg1: i32) -> (i32, i32) {
    %c0_i32 = arith.constant 0 : i32
    %c0_i32_0 = arith.constant 0 : i32
    %c0_i32_1 = arith.constant 0 : i32
    return %c0_i32, %c0_i32_0 : i32, i32
  }
  func.func @transform_3(%arg0: i32, %arg1: i32) -> (i32, i32) {
    %c0_i32 = arith.constant 0 : i32
    %c0_i32_0 = arith.constant 0 : i32
    %c0_i32_1 = arith.constant 0 : i32
    return %c0_i32, %c0_i32_0 : i32, i32
  }
  func.func @transform_4(%arg0: i32, %arg1: i32) -> (i32, i32) {
    %c0_i32 = arith.constant 0 : i32
    %c0_i32_0 = arith.constant 0 : i32
    %c0_i32_1 = arith.constant 0 : i32
    return %c0_i32, %c0_i32_0 : i32, i32
  }
  func.func @transform_5(%arg0: i32, %arg1: i32) -> (i32, i32) {
    %c0_i32 = arith.constant 0 : i32
    %c0_i32_0 = arith.constant 0 : i32
    %c0_i32_1 = arith.constant 0 : i32
    return %c0_i32, %c0_i32_0 : i32, i32
  }
  func.func @transform_6(%arg0: i32, %arg1: i32) -> (i32, i32) {
    %c0_i32 = arith.constant 0 : i32
    %c0_i32_0 = arith.constant 0 : i32
    %c0_i32_1 = arith.constant 0 : i32
    return %c0_i32, %c0_i32_0 : i32, i32
  }
  func.func @transform_7(%arg0: i32, %arg1: i32) -> (i32, i32) {
    %c0_i32 = arith.constant 0 : i32
    %c0_i32_0 = arith.constant 0 : i32
    %c0_i32_1 = arith.constant 0 : i32
    return %c0_i32, %c0_i32_0 : i32, i32
  }
  func.func @transform_8(%arg0: i32, %arg1: i32) -> (i32, i32) {
    %c0_i32 = arith.constant 0 : i32
    %c0_i32_0 = arith.constant 0 : i32
    %c0_i32_1 = arith.constant 0 : i32
    return %c0_i32, %c0_i32_0 : i32, i32
  }
  func.func @transform_9(%arg0: i32, %arg1: i32) -> (i32, i32) {
    %c0_i32 = arith.constant 0 : i32
    %c0_i32_0 = arith.constant 0 : i32
    %c0_i32_1 = arith.constant 0 : i32
    return %c0_i32, %c0_i32_0 : i32, i32
  }
  func.func @transform_10(%arg0: i32, %arg1: i32) -> (i32, i32) {
    %c0_i32 = arith.constant 0 : i32
    %c0_i32_0 = arith.constant 0 : i32
    %c0_i32_1 = arith.constant 0 : i32
    return %c0_i32, %c0_i32_0 : i32, i32
  }
  func.func @transform_11(%arg0: i32, %arg1: i32) -> (i32, i32) {
    %c0_i32 = arith.constant 0 : i32
    %c0_i32_0 = arith.constant 0 : i32
    return %c0_i32, %arg1 : i32, i32
  }
  func.func @transform_12(%arg0: i32, %arg1: i32) -> (i32, i32) {
    %c0_i32 = arith.constant 0 : i32
    %c0_i32_0 = arith.constant 0 : i32
    return %c0_i32, %arg1 : i32, i32
  }
  func.func @transform_13(%arg0: i32, %arg1: i32) -> (i32, i32) {
    %c0_i32 = arith.constant 0 : i32
    return %arg0, %arg1 : i32, i32
  }
}

</mosaic_0001>

<llo_original>
// kernel: mlp_forward.1
$region0: #{mlp_forward.1}
  #allocation0 [shape = 'u32[]', space=smem, size = 0x4, offset = 0x4, fixed_abs, tag = 'smem constant byte address 0x4 - core index']
  #allocation1 [shape = 'u32[144,128]{1,0:T(1,128)}', space=vmem, size = 0x12000, scoped, tag = 'internal scratch']
  #allocation2 [shape = 'bf16[8,128]{1,0:T(8,128)(2,1)}', space=vmem, size = 0x800, scoped, tag = 'scratch operand']
  %s0 = inlined_call_operand.vmem [shape: bf16[8,64], index: 0, kind: input, shape index: {}]
  %s1 = inlined_call_operand.vmem [shape: bf16[8,256], index: 1, kind: input, shape index: {}]
  %s2 = inlined_call_operand.vmem [shape: bf16[64,128], index: 2, kind: input, shape index: {}]
  %s3 = inlined_call_operand.vmem [shape: f32[1,128], index: 3, kind: input, shape index: {}]
  %s4 = inlined_call_operand.vmem [shape: bf16[256,128], index: 4, kind: input, shape index: {}]
  %s5 = inlined_call_operand.vmem [shape: f32[1,128], index: 5, kind: input, shape index: {}]
  %s6 = inlined_call_operand.vmem [shape: bf16[128,128], index: 6, kind: input, shape index: {}]
  %s7 = inlined_call_operand.vmem [shape: bf16[128,128], index: 7, kind: input, shape index: {}]
  %s8 = inlined_call_operand.vmem [shape: f32[1,128], index: 8, kind: input, shape index: {}]
  %s9 = inlined_call_operand.vmem [shape: bf16[128,128], index: 9, kind: input, shape index: {}]
  %s10 = inlined_call_operand.vmem [shape: f32[1,128], index: 10, kind: input, shape index: {}]
  %s11 = inlined_call_operand.vmem [shape: bf16[128,2048], index: 11, kind: input, shape index: {}]
  %s12 = inlined_call_operand.vmem [shape: f32[1,2048], index: 12, kind: input, shape index: {}]
  %s13 = inlined_call_operand.vmem [shape: f32[8,2048], index: 13, kind: output, shape index: {}]
  %s14 = sld [smem:[#allocation0]]
  $region112: #{mlp_forward.1} parent=0
    _
  %s16 = ssub.s32 1, %s14
  %s17 = scalar_select 0, %s16, %s14
  $region1: #{mlp_forward.1} parent=0
    #allocation3 [shape = 'u8[262144]{0}', space=vmem, size = 0x40000, scoped, tag = 'input window, operand 11']
    loop: start=0, step=1, limit=6
    $region2: #{mlp_forward.1} parent=1 // loop_pre_header
      _
    $region3: #{mlp_forward.1} parent=1 // loop_header
      %s19 = sphi 0, %s23
      %p20 = scmp.ge.s32.totalorder %s19, 6
      %s26 = sphi 0, %s38
      %s27 = sphi 0, %s34
      %s28 = sphi 0, %s26
      %s29 = sphi 0, %s27
      %s30 = sphi 0, %s28
      %s31 = sphi 0, %s29
      %s41 = sphi 0, %s43
      %s44 = sphi 0, %s41
      %s45 = sphi 0, %s44
      %s61 = sphi 0, %s45
      %s67 = sphi 0, %s69
      %s70 = sphi 0, %s67
      %s71 = sphi 0, %s70
      %s87 = sphi 0, %s71
      %s91 = sphi 0, %s91
      %s93 = sphi 0, %s91
      %s94 = sphi 0, %s93
      %s108 = sphi 0, %s94
      %s112 = sphi 0, %s112
      %s114 = sphi 0, %s112
      %s115 = sphi 0, %s114
      %s129 = sphi 0, %s115
      %s133 = sphi 0, %s133
      %s135 = sphi 0, %s133
      %s136 = sphi 0, %s135
      %s150 = sphi 0, %s136
      %s154 = sphi 0, %s154
      %s156 = sphi 0, %s154
      %s157 = sphi 0, %s156
      %s171 = sphi 0, %s157
      %s175 = sphi 0, %s175
      %s177 = sphi 0, %s175
      %s178 = sphi 0, %s177
      %s192 = sphi 0, %s178
      %s196 = sphi 0, %s196
      %s198 = sphi 0, %s196
      %s199 = sphi 0, %s198
      %s213 = sphi 0, %s199
      %s217 = sphi 0, %s217
      %s219 = sphi 0, %s217
      %s220 = sphi 0, %s219
      %s234 = sphi 0, %s220
      %s238 = sphi 0, %s238
      %s240 = sphi 0, %s238
      %s241 = sphi 0, %s240
      %s255 = sphi 0, %s241
      %s259 = sphi 0, %s259
      %s261 = sphi 0, %s259
      %s262 = sphi 0, %s261
      %s276 = sphi 0, %s262
      %s282 = sphi 0, %s284
      %s285 = sphi 0, %s282
      %s286 = sphi 0, %s285
      %s302 = sphi 0, %s286
      %s308 = sphi 0, %s310
      %s311 = sphi 0, %s308
      %s312 = sphi 0, %s311
      %s328 = sphi 0, %s312
      %s336 = sphi 0, %s338
      %s339 = sphi 0, %s336
      %s340 = sphi 0, %s339
      %s356 = sphi 0, %s340
    $region4: #{mlp_forward.1} parent=1 // loop_header_branch
      %22 = sbr.rel (%p20) target = $region8
    $region5: #{mlp_forward.1} parent=1 // loop_body
      %s24 = ssub.s32 %s19, 1
      %s25 = ssub.s32 %s19, 2
      %s32 = sadd.s32 1, %s27
      %p33 = scmp.ge.s32.totalorder %s32, 4
      %s34 = scalar_select %p33, 0, %s32
      %s35 = sadd.s32 1, %s26
      %s36 = scalar_select %p33, %s35, %s26
      %p37 = scmp.ge.s32.totalorder %s36, 1
      %s38 = scalar_select %p37, 0, %s36
      %s39 = ssub.s32 %s26, %s38
      %p40 = scmp.eq.s32.totalorder %s39, 0
      %s42 = sadd.s32 %s41, 1
      %s43 = scalar_select %p40, %s41, %s42
      %p46 = pneg %p40
      %p47 = scmp.eq.s32.totalorder %s19, 3
      %p48 = por %p46, %p47
      %p49 = scmp.ne.s32.totalorder %s41, %s44
      %p50 = scmp.eq.s32.totalorder %s19, 0
      %p51 = por %p49, %p50
      %p52 = scmp.ne.s32.totalorder %s41, %s44
      %p53 = scmp.eq.s32.totalorder %s24, 3
      %p54 = por %p52, %p53
      %p55 = scmp.ne.s32.totalorder %s44, %s45
      %p56 = scmp.eq.s32.totalorder %s24, 0
      %p57 = por %p55, %p56
      %p58 = scmp.ne.s32.totalorder %s44, %s45
      %p59 = scmp.eq.s32.totalorder %s25, 3
      %p60 = por %p58, %p59
      %p62 = scmp.ne.s32.totalorder %s45, %s61
      %p63 = scmp.eq.s32.totalorder %s25, 0
      %p64 = por %p62, %p63
      %s65 = ssub.s32 %s26, %s38
      %p66 = scmp.eq.s32.totalorder %s65, 0
      %s68 = sadd.s32 %s67, 1
      %s69 = scalar_select %p66, %s67, %s68
      %p72 = pneg %p66
      %p73 = scmp.eq.s32.totalorder %s19, 3
      %p74 = por %p72, %p73
      %p75 = scmp.ne.s32.totalorder %s67, %s70
      %p76 = scmp.eq.s32.totalorder %s19, 0
      %p77 = por %p75, %p76
      %p78 = scmp.ne.s32.totalorder %s67, %s70
      %p79 = scmp.eq.s32.totalorder %s24, 3
      %p80 = por %p78, %p79
      %p81 = scmp.ne.s32.totalorder %s70, %s71
      %p82 = scmp.eq.s32.totalorder %s24, 0
      %p83 = por %p81, %p82
      %p84 = scmp.ne.s32.totalorder %s70, %s71
      %p85 = scmp.eq.s32.totalorder %s25, 3
      %p86 = por %p84, %p85
      %p88 = scmp.ne.s32.totalorder %s71, %s87
      %p89 = scmp.eq.s32.totalorder %s25, 0
      %p90 = por %p88, %p89
      %s92 = sadd.s32 %s91, 1
      %p95 = scmp.eq.s32.totalorder %s19, 3
      %p96 = scmp.ne.s32.totalorder %s91, %s93
      %p97 = scmp.eq.s32.totalorder %s19, 0
      %p98 = por %p96, %p97
      %p99 = scmp.ne.s32.totalorder %s91, %s93
      %p100 = scmp.eq.s32.totalorder %s24, 3
      %p101 = por %p99, %p100
      %p102 = scmp.ne.s32.totalorder %s93, %s94
      %p103 = scmp.eq.s32.totalorder %s24, 0
      %p104 = por %p102, %p103
      %p105 = scmp.ne.s32.totalorder %s93, %s94
      %p106 = scmp.eq.s32.totalorder %s25, 3
      %p107 = por %p105, %p106
      %p109 = scmp.ne.s32.totalorder %s94, %s108
      %p110 = scmp.eq.s32.totalorder %s25, 0
      %p111 = por %p109, %p110
      %s113 = sadd.s32 %s112, 1
      %p116 = scmp.eq.s32.totalorder %s19, 3
      %p117 = scmp.ne.s32.totalorder %s112, %s114
      %p118 = scmp.eq.s32.totalorder %s19, 0
      %p119 = por %p117, %p118
      %p120 = scmp.ne.s32.totalorder %s112, %s114
      %p121 = scmp.eq.s32.totalorder %s24, 3
      %p122 = por %p120, %p121
      %p123 = scmp.ne.s32.totalorder %s114, %s115
      %p124 = scmp.eq.s32.totalorder %s24, 0
      %p125 = por %p123, %p124
      %p126 = scmp.ne.s32.totalorder %s114, %s115
      %p127 = scmp.eq.s32.totalorder %s25, 3
      %p128 = por %p126, %p127
      %p130 = scmp.ne.s32.totalorder %s115, %s129
      %p131 = scmp.eq.s32.totalorder %s25, 0
      %p132 = por %p130, %p131
      %s134 = sadd.s32 %s133, 1
      %p137 = scmp.eq.s32.totalorder %s19, 3
      %p138 = scmp.ne.s32.totalorder %s133, %s135
      %p139 = scmp.eq.s32.totalorder %s19, 0
      %p140 = por %p138, %p139
      %p141 = scmp.ne.s32.totalorder %s133, %s135
      %p142 = scmp.eq.s32.totalorder %s24, 3
      %p143 = por %p141, %p142
      %p144 = scmp.ne.s32.totalorder %s135, %s136
      %p145 = scmp.eq.s32.totalorder %s24, 0
      %p146 = por %p144, %p145
      %p147 = scmp.ne.s32.totalorder %s135, %s136
      %p148 = scmp.eq.s32.totalorder %s25, 3
      %p149 = por %p147, %p148
      %p151 = scmp.ne.s32.totalorder %s136, %s150
      %p152 = scmp.eq.s32.totalorder %s25, 0
      %p153 = por %p151, %p152
      %s155 = sadd.s32 %s154, 1
      %p158 = scmp.eq.s32.totalorder %s19, 3
      %p159 = scmp.ne.s32.totalorder %s154, %s156
      %p160 = scmp.eq.s32.totalorder %s19, 0
      %p161 = por %p159, %p160
      %p162 = scmp.ne.s32.totalorder %s154, %s156
      %p163 = scmp.eq.s32.totalorder %s24, 3
      %p164 = por %p162, %p163
      %p165 = scmp.ne.s32.totalorder %s156, %s157
      %p166 = scmp.eq.s32.totalorder %s24, 0
      %p167 = por %p165, %p166
      %p168 = scmp.ne.s32.totalorder %s156, %s157
      %p169 = scmp.eq.s32.totalorder %s25, 3
      %p170 = por %p168, %p169
      %p172 = scmp.ne.s32.totalorder %s157, %s171
      %p173 = scmp.eq.s32.totalorder %s25, 0
      %p174 = por %p172, %p173
      %s176 = sadd.s32 %s175, 1
      %p179 = scmp.eq.s32.totalorder %s19, 3
      %p180 = scmp.ne.s32.totalorder %s175, %s177
      %p181 = scmp.eq.s32.totalorder %s19, 0
      %p182 = por %p180, %p181
      %p183 = scmp.ne.s32.totalorder %s175, %s177
      %p184 = scmp.eq.s32.totalorder %s24, 3
      %p185 = por %p183, %p184
      %p186 = scmp.ne.s32.totalorder %s177, %s178
      %p187 = scmp.eq.s32.totalorder %s24, 0
      %p188 = por %p186, %p187
      %p189 = scmp.ne.s32.totalorder %s177, %s178
      %p190 = scmp.eq.s32.totalorder %s25, 3
      %p191 = por %p189, %p190
      %p193 = scmp.ne.s32.totalorder %s178, %s192
      %p194 = scmp.eq.s32.totalorder %s25, 0
      %p195 = por %p193, %p194
      %s197 = sadd.s32 %s196, 1
      %p200 = scmp.eq.s32.totalorder %s19, 3
      %p201 = scmp.ne.s32.totalorder %s196, %s198
      %p202 = scmp.eq.s32.totalorder %s19, 0
      %p203 = por %p201, %p202
      %p204 = scmp.ne.s32.totalorder %s196, %s198
      %p205 = scmp.eq.s32.totalorder %s24, 3
      %p206 = por %p204, %p205
      %p207 = scmp.ne.s32.totalorder %s198, %s199
      %p208 = scmp.eq.s32.totalorder %s24, 0
      %p209 = por %p207, %p208
      %p210 = scmp.ne.s32.totalorder %s198, %s199
      %p211 = scmp.eq.s32.totalorder %s25, 3
      %p212 = por %p210, %p211
      %p214 = scmp.ne.s32.totalorder %s199, %s213
      %p215 = scmp.eq.s32.totalorder %s25, 0
      %p216 = por %p214, %p215
      %s218 = sadd.s32 %s217, 1
      %p221 = scmp.eq.s32.totalorder %s19, 3
      %p222 = scmp.ne.s32.totalorder %s217, %s219
      %p223 = scmp.eq.s32.totalorder %s19, 0
      %p224 = por %p222, %p223
      %p225 = scmp.ne.s32.totalorder %s217, %s219
      %p226 = scmp.eq.s32.totalorder %s24, 3
      %p227 = por %p225, %p226
      %p228 = scmp.ne.s32.totalorder %s219, %s220
      %p229 = scmp.eq.s32.totalorder %s24, 0
      %p230 = por %p228, %p229
      %p231 = scmp.ne.s32.totalorder %s219, %s220
      %p232 = scmp.eq.s32.totalorder %s25, 3
      %p233 = por %p231, %p232
      %p235 = scmp.ne.s32.totalorder %s220, %s234
      %p236 = scmp.eq.s32.totalorder %s25, 0
      %p237 = por %p235, %p236
      %s239 = sadd.s32 %s238, 1
      %p242 = scmp.eq.s32.totalorder %s19, 3
      %p243 = scmp.ne.s32.totalorder %s238, %s240
      %p244 = scmp.eq.s32.totalorder %s19, 0
      %p245 = por %p243, %p244
      %p246 = scmp.ne.s32.totalorder %s238, %s240
      %p247 = scmp.eq.s32.totalorder %s24, 3
      %p248 = por %p246, %p247
      %p249 = scmp.ne.s32.totalorder %s240, %s241
      %p250 = scmp.eq.s32.totalorder %s24, 0
      %p251 = por %p249, %p250
      %p252 = scmp.ne.s32.totalorder %s240, %s241
      %p253 = scmp.eq.s32.totalorder %s25, 3
      %p254 = por %p252, %p253
      %p256 = scmp.ne.s32.totalorder %s241, %s255
      %p257 = scmp.eq.s32.totalorder %s25, 0
      %p258 = por %p256, %p257
      %s260 = sadd.s32 %s259, 1
      %p263 = scmp.eq.s32.totalorder %s19, 3
      %p264 = scmp.ne.s32.totalorder %s259, %s261
      %p265 = scmp.eq.s32.totalorder %s19, 0
      %p266 = por %p264, %p265
      %p267 = scmp.ne.s32.totalorder %s259, %s261
      %p268 = scmp.eq.s32.totalorder %s24, 3
      %p269 = por %p267, %p268
      %p270 = scmp.ne.s32.totalorder %s261, %s262
      %p271 = scmp.eq.s32.totalorder %s24, 0
      %p272 = por %p270, %p271
      %p273 = scmp.ne.s32.totalorder %s261, %s262
      %p274 = scmp.eq.s32.totalorder %s25, 3
      %p275 = por %p273, %p274
      %p277 = scmp.ne.s32.totalorder %s262, %s276
      %p278 = scmp.eq.s32.totalorder %s25, 0
      %p279 = por %p277, %p278
      %s280 = ssub.s32 %s27, %s34
      %p281 = scmp.eq.s32.totalorder %s280, 0
      %s283 = sadd.s32 %s282, 1
      %s284 = scalar_select %p281, %s282, %s283
      %p287 = pneg %p281
      %p288 = scmp.eq.s32.totalorder %s19, 3
      %p289 = por %p287, %p288
      %p290 = scmp.ne.s32.totalorder %s282, %s285
      %p291 = scmp.eq.s32.totalorder %s19, 0
      %p292 = por %p290, %p291
      %p293 = scmp.ne.s32.totalorder %s282, %s285
      %p294 = scmp.eq.s32.totalorder %s24, 3
      %p295 = por %p293, %p294
      %p296 = scmp.ne.s32.totalorder %s285, %s286
      %p297 = scmp.eq.s32.totalorder %s24, 0
      %p298 = por %p296, %p297
      %p299 = scmp.ne.s32.totalorder %s285, %s286
      %p300 = scmp.eq.s32.totalorder %s25, 3
      %p301 = por %p299, %p300
      %p303 = scmp.ne.s32.totalorder %s286, %s302
      %p304 = scmp.eq.s32.totalorder %s25, 0
      %p305 = por %p303, %p304
      %s306 = ssub.s32 %s27, %s34
      %p307 = scmp.eq.s32.totalorder %s306, 0
      %s309 = sadd.s32 %s308, 1
      %s310 = scalar_select %p307, %s308, %s309
      %p313 = pneg %p307
      %p314 = scmp.eq.s32.totalorder %s19, 3
      %p315 = por %p313, %p314
      %p316 = scmp.ne.s32.totalorder %s308, %s311
      %p317 = scmp.eq.s32.totalorder %s19, 0
      %p318 = por %p316, %p317
      %p319 = scmp.ne.s32.totalorder %s308, %s311
      %p320 = scmp.eq.s32.totalorder %s24, 3
      %p321 = por %p319, %p320
      %p322 = scmp.ne.s32.totalorder %s311, %s312
      %p323 = scmp.eq.s32.totalorder %s24, 0
      %p324 = por %p322, %p323
      %p325 = scmp.ne.s32.totalorder %s311, %s312
      %p326 = scmp.eq.s32.totalorder %s25, 3
      %p327 = por %p325, %p326
      %p329 = scmp.ne.s32.totalorder %s312, %s328
      %p330 = scmp.eq.s32.totalorder %s25, 0
      %p331 = por %p329, %p330
      %s332 = ssub.s32 %s26, %s38
      %s333 = ssub.s32 %s27, %s34
      %s334 = sor.u32 %s332, %s333
      %p335 = scmp.eq.s32.totalorder %s334, 0
      %s337 = sadd.s32 %s336, 1
      %s338 = scalar_select %p335, %s336, %s337
      %p341 = pneg %p335
      %p342 = scmp.eq.s32.totalorder %s19, 3
      %p343 = por %p341, %p342
      %p344 = scmp.ne.s32.totalorder %s336, %s339
      %p345 = scmp.eq.s32.totalorder %s19, 0
      %p346 = por %p344, %p345
      %p347 = scmp.ne.s32.totalorder %s336, %s339
      %p348 = scmp.eq.s32.totalorder %s24, 3
      %p349 = por %p347, %p348
      %p350 = scmp.ne.s32.totalorder %s339, %s340
      %p351 = scmp.eq.s32.totalorder %s24, 0
      %p352 = por %p350, %p351
      %p353 = scmp.ne.s32.totalorder %s339, %s340
      %p354 = scmp.eq.s32.totalorder %s25, 3
      %p355 = por %p353, %p354
      %p357 = scmp.ne.s32.totalorder %s340, %s356
      %p358 = scmp.eq.s32.totalorder %s25, 0
      %p359 = por %p357, %p358
      %p360 = scmp.le.s32.totalorder 1, %s19
      %p361 = scmp.lt.s32.totalorder %s19, 5
      %p362 = pnand %p360, %p361
      %p363 = pneg %p362
      // Predicated region
      $region9: #{mlp_forward.1} parent=5 // pred_check
        _
      $region10: #{mlp_forward.1} parent=5 // pred_check_branch
        %365 = sbr.rel (%p362) target = $region12
      $region11: #{mlp_forward.1} parent=5 // pred_region
        %s366 = ssub.s32 %s19, 1
        // Predicated region
        $region13: #{mlp_forward.1} parent=11 // pred_check
          %p367 = pneg %p57
        $region14: #{mlp_forward.1} parent=11 // pred_check_branch
          %369 = sbr.rel (%p367) target = $region16
        $region15: #{mlp_forward.1} parent=11 // pred_region
          %p370 = scmp.lt.s32.totalorder %s28, 0
          %s371 = scalar_select %p370, %s28, 0
          %s372 = smul.addr %s371, 4
          %s373 = scalar_lea.vmem %s0, %s372
        $region16: #{mlp_forward.1} parent=11 // pred_fallthru
          _
        // Predicated region
        $region17: #{mlp_forward.1} parent=11 // pred_check
          %p374 = pneg %p83
        $region18: #{mlp_forward.1} parent=11 // pred_check_branch
          %376 = sbr.rel (%p374) target = $region20
        $region19: #{mlp_forward.1} parent=11 // pred_region
          %p377 = scmp.lt.s32.totalorder %s28, 0
          %s378 = scalar_select %p377, %s28, 0
          %s379 = smul.addr %s378, 2
          %s380 = smul.addr %s379, 4
          %s381 = scalar_lea.vmem %s1, %s380
        $region20: #{mlp_forward.1} parent=11 // pred_fallthru
          _
        // Predicated region
        $region21: #{mlp_forward.1} parent=11 // pred_check
          %p382 = pneg %p104
        $region22: #{mlp_forward.1} parent=11 // pred_check_branch
          %384 = sbr.rel (%p382) target = $region24
        $region23: #{mlp_forward.1} parent=11 // pred_region
          _
        $region24: #{mlp_forward.1} parent=11 // pred_fallthru
          _
        // Predicated region
        $region25: #{mlp_forward.1} parent=11 // pred_check
          %p385 = pneg %p125
        $region26: #{mlp_forward.1} parent=11 // pred_check_branch
          %387 = sbr.rel (%p385) target = $region28
        $region27: #{mlp_forward.1} parent=11 // pred_region
          _
        $region28: #{mlp_forward.1} parent=11 // pred_fallthru
          _
        // Predicated region
        $region29: #{mlp_forward.1} parent=11 // pred_check
          %p388 = pneg %p146
        $region30: #{mlp_forward.1} parent=11 // pred_check_branch
          %390 = sbr.rel (%p388) target = $region32
        $region31: #{mlp_forward.1} parent=11 // pred_region
          _
        $region32: #{mlp_forward.1} parent=11 // pred_fallthru
          _
        // Predicated region
        $region33: #{mlp_forward.1} parent=11 // pred_check
          %p391 = pneg %p167
        $region34: #{mlp_forward.1} parent=11 // pred_check_branch
          %393 = sbr.rel (%p391) target = $region36
        $region35: #{mlp_forward.1} parent=11 // pred_region
          _
        $region36: #{mlp_forward.1} parent=11 // pred_fallthru
          _
        // Predicated region
        $region37: #{mlp_forward.1} parent=11 // pred_check
          %p394 = pneg %p188
        $region38: #{mlp_forward.1} parent=11 // pred_check_branch
          %396 = sbr.rel (%p394) target = $region40
        $region39: #{mlp_forward.1} parent=11 // pred_region
          _
        $region40: #{mlp_forward.1} parent=11 // pred_fallthru
          _
        // Predicated region
        $region41: #{mlp_forward.1} parent=11 // pred_check
          %p397 = pneg %p209
        $region42: #{mlp_forward.1} parent=11 // pred_check_branch
          %399 = sbr.rel (%p397) target = $region44
        $region43: #{mlp_forward.1} parent=11 // pred_region
          _
        $region44: #{mlp_forward.1} parent=11 // pred_fallthru
          _
        // Predicated region
        $region45: #{mlp_forward.1} parent=11 // pred_check
          %p400 = pneg %p230
        $region46: #{mlp_forward.1} parent=11 // pred_check_branch
          %402 = sbr.rel (%p400) target = $region48
        $region47: #{mlp_forward.1} parent=11 // pred_region
          _
        $region48: #{mlp_forward.1} parent=11 // pred_fallthru
          _
        // Predicated region
        $region49: #{mlp_forward.1} parent=11 // pred_check
          %p403 = pneg %p251
        $region50: #{mlp_forward.1} parent=11 // pred_check_branch
          %405 = sbr.rel (%p403) target = $region52
        $region51: #{mlp_forward.1} parent=11 // pred_region
          _
        $region52: #{mlp_forward.1} parent=11 // pred_fallthru
          _
        // Predicated region
        $region53: #{mlp_forward.1} parent=11 // pred_check
          %p406 = pneg %p272
        $region54: #{mlp_forward.1} parent=11 // pred_check_branch
          %408 = sbr.rel (%p406) target = $region56
        $region55: #{mlp_forward.1} parent=11 // pred_region
          _
        $region56: #{mlp_forward.1} parent=11 // pred_fallthru
          _
      $region12: #{mlp_forward.1} parent=5 // pred_fallthru
        _
      %p409 = scmp.lt.s32.totalorder %s19, 4
      // Predicated region
      $region57: #{mlp_forward.1} parent=5 // pred_check
        %p410 = pneg %p409
      $region58: #{mlp_forward.1} parent=5 // pred_check_branch
        %412 = sbr.rel (%p410) target = $region60
      $region59: #{mlp_forward.1} parent=5 // pred_region
        // Predicated region
        $region61: #{mlp_forward.1} parent=59 // pred_check
          %p413 = pneg %p292
        $region62: #{mlp_forward.1} parent=59 // pred_check_branch
          %415 = sbr.rel (%p413) target = $region64
        $region63: #{mlp_forward.1} parent=59 // pred_region
          %s416 = sand.u32 %s282, 1
          %s417 = sand.u32 %s282, 1
          %s418 = smul.addr %s417, 256
          %s419 = scalar_lea.vmem [#allocation3], %s418
          %s420 = smul.u32 4, %s27
          %s421 = smul.addr %s420, 4
          %s422 = scalar_lea.vmem %s11, %s421
          // Predicated region
          $region65: #{mlp_forward.1} parent=63 // pred_check
            _
          $region66: #{mlp_forward.1} parent=63 // pred_check_branch
            %424 = sbr.rel (0) target = $region68
          $region67: #{mlp_forward.1} parent=63 // pred_region
            // Predicated region
            $region69: #{mlp_forward.1} parent=67 // pred_check
              _
            $region70: #{mlp_forward.1} parent=67 // pred_check_branch
              %426 = sbr.rel (0) target = $region72
            $region71: #{mlp_forward.1} parent=67 // pred_region
              loop: start=0, step=1, limit=1
              $region73: #{mlp_forward.1} parent=71 // loop_pre_header
                _
              $region74: #{mlp_forward.1} parent=71 // loop_header
                %s428 = sphi 0, %s432
                %p429 = scmp.ge.s32.totalorder %s428, 1
                %s433 = sphi %s422, %s422
                %s434 = sphi %s419, %s419
              $region75: #{mlp_forward.1} parent=71 // loop_header_branch
                %431 = sbr.rel (%p429) target = $region79
              $region76: #{mlp_forward.1} parent=71 // loop_body
                %v435 = vld [vmem:[%s433] sm:$0xff]
                %436 = vst [vmem:[%s434] sm:$0xff] %v435
                %v437 = vld [vmem:[%s433 + $0x8] sm:$0xff]
                %438 = vst [vmem:[%s434 + $0x8] sm:$0xff] %v437
                %v439 = vld [vmem:[%s433 + $0x40] sm:$0xff]
                %440 = vst [vmem:[%s434 + $0x10] sm:$0xff] %v439
                %v441 = vld [vmem:[%s433 + $0x48] sm:$0xff]
                %442 = vst [vmem:[%s434 + $0x18] sm:$0xff] %v441
                %v443 = vld [vmem:[%s433 + $0x80] sm:$0xff]
                %444 = vst [vmem:[%s434 + $0x20] sm:$0xff] %v443
                %v445 = vld [vmem:[%s433 + $0x88] sm:$0xff]
                %446 = vst [vmem:[%s434 + $0x28] sm:$0xff] %v445
                %v447 = vld [vmem:[%s433 + $0xc0] sm:$0xff]
                %448 = vst [vmem:[%s434 + $0x30] sm:$0xff] %v447
                %v449 = vld [vmem:[%s433 + $0xc8] sm:$0xff]
                %450 = vst [vmem:[%s434 + $0x38] sm:$0xff] %v449
                %v451 = vld [vmem:[%s433 + $0x100] sm:$0xff]
                %452 = vst [vmem:[%s434 + $0x40] sm:$0xff] %v451
                %v453 = vld [vmem:[%s433 + $0x108] sm:$0xff]
                %454 = vst [vmem:[%s434 + $0x48] sm:$0xff] %v453
                %v455 = vld [vmem:[%s433 + $0x140] sm:$0xff]
                %456 = vst [vmem:[%s434 + $0x50] sm:$0xff] %v455
                %v457 = vld [vmem:[%s433 + $0x148] sm:$0xff]
                %458 = vst [vmem:[%s434 + $0x58] sm:$0xff] %v457
                %v459 = vld [vmem:[%s433 + $0x180] sm:$0xff]
                %460 = vst [vmem:[%s434 + $0x60] sm:$0xff] %v459
                %v461 = vld [vmem:[%s433 + $0x188] sm:$0xff]
                %462 = vst [vmem:[%s434 + $0x68] sm:$0xff] %v461
                %v463 = vld [vmem:[%s433 + $0x1c0] sm:$0xff]
                %464 = vst [vmem:[%s434 + $0x70] sm:$0xff] %v463
                %v465 = vld [vmem:[%s433 + $0x1c8] sm:$0xff]
                %466 = vst [vmem:[%s434 + $0x78] sm:$0xff] %v465
                %v467 = vld [vmem:[%s433 + $0x200] sm:$0xff]
                %468 = vst [vmem:[%s434 + $0x80] sm:$0xff] %v467
                %v469 = vld [vmem:[%s433 + $0x208] sm:$0xff]
                %470 = vst [vmem:[%s434 + $0x88] sm:$0xff] %v469
                %v471 = vld [vmem:[%s433 + $0x240] sm:$0xff]
                %472 = vst [vmem:[%s434 + $0x90] sm:$0xff] %v471
                %v473 = vld [vmem:[%s433 + $0x248] sm:$0xff]
                %474 = vst [vmem:[%s434 + $0x98] sm:$0xff] %v473
                %v475 = vld [vmem:[%s433 + $0x280] sm:$0xff]
                %476 = vst [vmem:[%s434 + $0xa0] sm:$0xff] %v475
                %v477 = vld [vmem:[%s433 + $0x288] sm:$0xff]
                %478 = vst [vmem:[%s434 + $0xa8] sm:$0xff] %v477
                %v479 = vld [vmem:[%s433 + $0x2c0] sm:$0xff]
                %480 = vst [vmem:[%s434 + $0xb0] sm:$0xff] %v479
                %v481 = vld [vmem:[%s433 + $0x2c8] sm:$0xff]
                %482 = vst [vmem:[%s434 + $0xb8] sm:$0xff] %v481
                %v483 = vld [vmem:[%s433 + $0x300] sm:$0xff]
                %484 = vst [vmem:[%s434 + $0xc0] sm:$0xff] %v483
                %v485 = vld [vmem:[%s433 + $0x308] sm:$0xff]
                %486 = vst [vmem:[%s434 + $0xc8] sm:$0xff] %v485
                %v487 = vld [vmem:[%s433 + $0x340] sm:$0xff]
                %488 = vst [vmem:[%s434 + $0xd0] sm:$0xff] %v487
                %v489 = vld [vmem:[%s433 + $0x348] sm:$0xff]
                %490 = vst [vmem:[%s434 + $0xd8] sm:$0xff] %v489
                %v491 = vld [vmem:[%s433 + $0x380] sm:$0xff]
                %492 = vst [vmem:[%s434 + $0xe0] sm:$0xff] %v491
                %v493 = vld [vmem:[%s433 + $0x388] sm:$0xff]
                %494 = vst [vmem:[%s434 + $0xe8] sm:$0xff] %v493
                %v495 = vld [vmem:[%s433 + $0x3c0] sm:$0xff]
                %496 = vst [vmem:[%s434 + $0xf0] sm:$0xff] %v495
                %v497 = vld [vmem:[%s433 + $0x3c8] sm:$0xff]
                %498 = vst [vmem:[%s434 + $0xf8] sm:$0xff] %v497
              $region77: #{mlp_forward.1} parent=71 // loop_footer
                %s432 = sadd.s32 1, %s428
              $region78: #{mlp_forward.1} parent=71 // loop_footer_branch
                %427 = sbr.rel target = $region74
              $region79: #{mlp_forward.1} parent=71 // loop_exit
                _
            $region72: #{mlp_forward.1} parent=67 // pred_fallthru
              _
            // Predicated region
            $region80: #{mlp_forward.1} parent=67 // pred_check
              _
            $region81: #{mlp_forward.1} parent=67 // pred_check_branch
              %500 = sbr.rel target = $region83
            $region82: #{mlp_forward.1} parent=67 // pred_region
              _
            $region83: #{mlp_forward.1} parent=67 // pred_fallthru
              _
          $region68: #{mlp_forward.1} parent=63 // pred_fallthru
            _
          %501 = vnop
        $region64: #{mlp_forward.1} parent=59 // pred_fallthru
          _
        // Predicated region
        $region84: #{mlp_forward.1} parent=59 // pred_check
          %p502 = pneg %p318
        $region85: #{mlp_forward.1} parent=59 // pred_check_branch
          %504 = sbr.rel (%p502) target = $region87
        $region86: #{mlp_forward.1} parent=59 // pred_region
          %s505 = smul.u32 4, %s27
          %p506 = scmp.lt.s32.totalorder %s505, 15
          %s507 = scalar_select %p506, %s505, 15
          %s508 = scalar_lea.vmem %s12, %s507
          %s509 = smul.u32 4, %s27
        $region87: #{mlp_forward.1} parent=59 // pred_fallthru
          _
      $region60: #{mlp_forward.1} parent=5 // pred_fallthru
        _
      %p510 = scmp.le.s32.totalorder 1, %s19
      %p511 = scmp.lt.s32.totalorder %s19, 5
      %p512 = pnand %p510, %p511
      %p513 = pneg %p512
      // Predicated region
      $region88: #{mlp_forward.1} parent=5 // pred_check
        _
      $region89: #{mlp_forward.1} parent=5 // pred_check_branch
        %515 = sbr.rel (%p512) target = $region91
      $region90: #{mlp_forward.1} parent=5 // pred_region
        %s516 = ssub.s32 %s19, 1
        %s517 = sand.u32 %s285, 1
        %s518 = sand.u32 %s285, 1
        %s519 = smul.addr %s518, 256
        %s520 = scalar_lea.vmem [#allocation3], %s519
        // Predicated region
        $region92: #{mlp_forward.1} parent=90 // pred_check
          %p521 = pneg %p298
        $region93: #{mlp_forward.1} parent=90 // pred_check_branch
          %523 = sbr.rel (%p521) target = $region95
        $region94: #{mlp_forward.1} parent=90 // pred_region
          _
        $region95: #{mlp_forward.1} parent=90 // pred_fallthru
          _
        %p524 = scmp.lt.s32.totalorder %s28, 0
        %s525 = scalar_select %p524, %s28, 0
        %s526 = smul.addr %s525, 4
        %s527 = scalar_lea.vmem %s0, %s526
        %p528 = pneg %p57
        %p529 = pneg %p54
        %p530 = scmp.lt.s32.totalorder %s28, 0
        %s531 = scalar_select %p530, %s28, 0
        %s532 = smul.addr %s531, 2
        %s533 = smul.addr %s532, 4
        %s534 = scalar_lea.vmem %s1, %s533
        %p535 = pneg %p83
        %p536 = pneg %p80
        %p537 = pneg %p104
        %p538 = pneg %p101
        %p539 = pneg %p125
        %p540 = pneg %p122
        %p541 = pneg %p146
        %p542 = pneg %p143
        %p543 = pneg %p167
        %p544 = pneg %p164
        %p545 = pneg %p188
        %p546 = pneg %p185
        %p547 = pneg %p209
        %p548 = pneg %p206
        %p549 = pneg %p230
        %p550 = pneg %p227
        %p551 = pneg %p251
        %p552 = pneg %p248
        %p553 = pneg %p272
        %p554 = pneg %p269
        %s555 = sand.u32 %s285, 1
        %s556 = sand.u32 %s285, 1
        %s557 = smul.addr %s556, 256
        %s558 = scalar_lea.vmem [#allocation3], %s557
        %p559 = pneg %p298
        %p560 = pneg %p295
        %s561 = smul.u32 4, %s29
        %p562 = scmp.lt.s32.totalorder %s561, 15
        %s563 = scalar_select %p562, %s561, 15
        %s564 = scalar_lea.vmem %s12, %s563
        %p565 = pneg %p324
        %p566 = pneg %p321
        %p567 = pneg %p352
        %p568 = pneg %p349
        %s569 = smul.u32 4, %s29
        %p570 = scmp.lt.s32.totalorder %s28, 0
        %s571 = scalar_select %p570, %s28, 0
        %p572 = scmp.lt.s32.totalorder %s569, 15
        %s573 = scalar_select %p572, %s569, 15
        %s574 = smul.addr %s571, 16
        %s575 = sadd.s32 %s573, %s574
        %s576 = smul.addr %s575, 8
        %s577 = scalar_lea.vmem %s13, %s576
        %p578 = scmp.lt.s32.totalorder %s28, 0
        %s579 = scalar_select %p578, %s28, 0
        %s580 = smul.addr %s579, 4
        %s581 = scalar_lea.vmem %s0, %s580
        %p582 = scmp.lt.s32.totalorder %s28, 0
        %s583 = scalar_select %p582, %s28, 0
        %s584 = smul.addr %s583, 2
        %s585 = smul.addr %s584, 4
        %s586 = scalar_lea.vmem %s1, %s585
        %s587 = smul.u32 4, %s29
        %s588 = smul.u32 4, %s29
        %p589 = scmp.lt.s32.totalorder %s588, 15
        %s590 = scalar_select %p589, %s588, 15
        %s591 = scalar_lea.vmem %s12, %s590
        %s592 = smul.u32 4, %s29
        %s593 = smul.u32 4, %s29
        %p594 = scmp.lt.s32.totalorder %s28, 0
        %s595 = scalar_select %p594, %s28, 0
        %p596 = scmp.lt.s32.totalorder %s593, 15
        %s597 = scalar_select %p596, %s593, 15
        %s598 = smul.addr %s595, 16
        %s599 = sadd.s32 %s597, %s598
        %s600 = smul.addr %s599, 8
        %s601 = scalar_lea.vmem %s13, %s600
        %s602 = smul.u32 4, %s29
        %p604 = scmp.eq.s32.totalorder %s29, 0
        // Predicated region
        $region96: #{mlp_forward.1} parent=90 // pred_check
          %p605 = pneg %p604
        $region97: #{mlp_forward.1} parent=90 // pred_check_branch
          %607 = sbr.rel (%p605) target = $region99
        $region98: #{mlp_forward.1} parent=90 // pred_region
          %v608 = vld [vmem:[%s581] sm:$0xf]
          %v609 = vld [vmem:[%s2] sm:$0xf]
          %v610 = vld [vmem:[%s2 + $0x4] sm:$0xf]
          %v611 = vld [vmem:[%s2 + $0x8] sm:$0xf]
          %v612 = vld [vmem:[%s2 + $0xc] sm:$0xf]
          %v613 = vld [vmem:[%s2 + $0x10] sm:$0xf]
          %v614 = vld [vmem:[%s2 + $0x14] sm:$0xf]
          %v615 = vld [vmem:[%s2 + $0x18] sm:$0xf]
          %v616 = vld [vmem:[%s2 + $0x1c] sm:$0xf]
          %v617 = vld [vmem:[%s3] sm:$0x1]
          %v619 = vlaneseq
          %v620 = vshrl.u32 %v619, 7
          %v621 = vsub.s32 0, %v620
          %v622 = vrot.slane %v617, %v621
          %v632 = vunpack.c.l.b16 %v609
          %v633 = vunpack.c.l.b16 %v610
          %v634 = vunpack.c.l.b16 %v611
          %v635 = vunpack.c.l.b16 %v612
          %v636 = vunpack.c.l.b16 %v613
          %v637 = vunpack.c.l.b16 %v614
          %v638 = vunpack.c.l.b16 %v615
          %v639 = vunpack.c.l.b16 %v616
          %v640 = vpack.c.b16 %v633, %v632
          %v641 = vpack.c.b16 %v635, %v634
          %v642 = vpack.c.b16 %v637, %v636
          %v643 = vpack.c.b16 %v639, %v638
          %vm648 = vcmask 523264
          %v650 = vsel %vm648, %v608, 0
          %652 = vmatprep.subr.bf16.mxu0 0
          %653 = vmatpush1.bf16.msra.mxu0 %v640
          %654 = vmatprep.subr.bf16.mxu0 0
          %655 = vmatpush1.bf16.msra.mxu0 %v641
          %656 = vmatprep.subr.bf16.mxu0 0
          %657 = vmatpush1.bf16.msra.mxu0 %v642
          %658 = vmatprep.subr.bf16.mxu0 0
          %659 = vmatpush1.bf16.msra.mxu0 %v643
          %660 = vmatprep.subr.bf16.mxu0 0
          %661 = vmatpush1.bf16.msra.mxu0 0
          %662 = vmatprep.subr.bf16.mxu0 0
          %663 = vmatpush1.bf16.msra.mxu0 0
          %664 = vmatprep.subr.bf16.mxu0 0
          %665 = vmatpush1.bf16.msra.mxu0 0
          %666 = vmatprep.subr.bf16.mxu0 0
          %667 = vmatpush1.bf16.msra.mxu0 0
          %668 = vmatprep.subr.bf16.mxu0 0
          %669 = vmatpush1.bf16.msra.mxu0 0
          %670 = vmatprep.subr.bf16.mxu0 0
          %671 = vmatpush1.bf16.msra.mxu0 0
          %672 = vmatprep.subr.bf16.mxu0 0
          %673 = vmatpush1.bf16.msra.mxu0 0
          %674 = vmatprep.subr.bf16.mxu0 0
          %675 = vmatpush1.bf16.msra.mxu0 0
          %676 = vmatprep.subr.bf16.mxu0 0
          %677 = vmatpush1.bf16.msra.mxu0 0
          %678 = vmatprep.subr.bf16.mxu0 0
          %679 = vmatpush1.bf16.msra.mxu0 0
          %680 = vmatprep.subr.bf16.mxu0 0
          %681 = vmatpush1.bf16.msra.mxu0 0
          %682 = vmatprep.subr.bf16.mxu0 0
          %683 = vmatpush1.bf16.msra.mxu0 0
          %684 = vmatprep.mubr.bf16.mxu0 0
          %685 = vmatmul.mubr.bf16.gmra.mrb[0].mxu0 %v650
          %v686 = vpop.f32.mrb[0].mxu0
          %v687 = vadd.f32 %v622, %v686
          %v688 = vpop.f32.mrb[0].mxu0
          %v689 = vpop.f32.mrb[0].mxu0
          %v690 = vpop.f32.mrb[0].mxu0
          %691 = vdwg.mxu0
          %v692 = vld [vmem:[%s586] sm:$0xff]
          %v693 = vld [vmem:[%s4] sm:$0xf]
          %v694 = vld [vmem:[%s4 + $0x4] sm:$0xf]
          %v695 = vld [vmem:[%s4 + $0x8] sm:$0xf]
          %v696 = vld [vmem:[%s4 + $0xc] sm:$0xf]
          %v697 = vld [vmem:[%s4 + $0x10] sm:$0xf]
          %v698 = vld [vmem:[%s4 + $0x14] sm:$0xf]
          %v699 = vld [vmem:[%s4 + $0x18] sm:$0xf]
          %v700 = vld [vmem:[%s4 + $0x1c] sm:$0xf]
          %v701 = vld [vmem:[%s4 + $0x20] sm:$0xf]
          %v702 = vld [vmem:[%s4 + $0x24] sm:$0xf]
          %v703 = vld [vmem:[%s4 + $0x28] sm:$0xf]
          %v704 = vld [vmem:[%s4 + $0x2c] sm:$0xf]
          %v705 = vld [vmem:[%s4 + $0x30] sm:$0xf]
          %v706 = vld [vmem:[%s4 + $0x34] sm:$0xf]
          %v707 = vld [vmem:[%s4 + $0x38] sm:$0xf]
          %v708 = vld [vmem:[%s4 + $0x3c] sm:$0xf]
          %v709 = vld [vmem:[%s4 + $0x40] sm:$0xf]
          %v710 = vld [vmem:[%s4 + $0x44] sm:$0xf]
          %v711 = vld [vmem:[%s4 + $0x48] sm:$0xf]
          %v712 = vld [vmem:[%s4 + $0x4c] sm:$0xf]
          %v713 = vld [vmem:[%s4 + $0x50] sm:$0xf]
          %v714 = vld [vmem:[%s4 + $0x54] sm:$0xf]
          %v715 = vld [vmem:[%s4 + $0x58] sm:$0xf]
          %v716 = vld [vmem:[%s4 + $0x5c] sm:$0xf]
          %v717 = vld [vmem:[%s4 + $0x60] sm:$0xf]
          %v718 = vld [vmem:[%s4 + $0x64] sm:$0xf]
          %v719 = vld [vmem:[%s4 + $0x68] sm:$0xf]
          %v720 = vld [vmem:[%s4 + $0x6c] sm:$0xf]
          %v721 = vld [vmem:[%s4 + $0x70] sm:$0xf]
          %v722 = vld [vmem:[%s4 + $0x74] sm:$0xf]
          %v723 = vld [vmem:[%s4 + $0x78] sm:$0xf]
          %v724 = vld [vmem:[%s4 + $0x7c] sm:$0xf]
          %v725 = vld [vmem:[%s5] sm:$0x1]
          %v727 = vlaneseq
          %v728 = vshrl.u32 %v727, 7
          %v729 = vsub.s32 0, %v728
          %v730 = vrot.slane %v725, %v729
          %v733 = vunpack.c.l.b16 %v692
          %v734 = vunpack.c.h.b16 %v692
          %v735 = vpack.c.b16 %v733, %v733
          %v736 = vpack.c.b16 %v734, %v734
          %v771 = vunpack.c.l.b16 %v693
          %v772 = vunpack.c.l.b16 %v694
          %v773 = vunpack.c.l.b16 %v695
          %v774 = vunpack.c.l.b16 %v696
          %v775 = vunpack.c.l.b16 %v697
          %v776 = vunpack.c.l.b16 %v698
          %v777 = vunpack.c.l.b16 %v699
          %v778 = vunpack.c.l.b16 %v700
          %v779 = vunpack.c.l.b16 %v701
          %v780 = vunpack.c.l.b16 %v702
          %v781 = vunpack.c.l.b16 %v703
          %v782 = vunpack.c.l.b16 %v704
          %v783 = vunpack.c.l.b16 %v705
          %v784 = vunpack.c.l.b16 %v706
          %v785 = vunpack.c.l.b16 %v707
          %v786 = vunpack.c.l.b16 %v708
          %v787 = vunpack.c.l.b16 %v709
          %v788 = vunpack.c.l.b16 %v710
          %v789 = vunpack.c.l.b16 %v711
          %v790 = vunpack.c.l.b16 %v712
          %v791 = vunpack.c.l.b16 %v713
          %v792 = vunpack.c.l.b16 %v714
          %v793 = vunpack.c.l.b16 %v715
          %v794 = vunpack.c.l.b16 %v716
          %v795 = vunpack.c.l.b16 %v717
          %v796 = vunpack.c.l.b16 %v718
          %v797 = vunpack.c.l.b16 %v719
          %v798 = vunpack.c.l.b16 %v720
          %v799 = vunpack.c.l.b16 %v721
          %v800 = vunpack.c.l.b16 %v722
          %v801 = vunpack.c.l.b16 %v723
          %v802 = vunpack.c.l.b16 %v724
          %v803 = vpack.c.b16 %v772, %v771
          %v804 = vpack.c.b16 %v774, %v773
          %v805 = vpack.c.b16 %v776, %v775
          %v806 = vpack.c.b16 %v778, %v777
          %v807 = vpack.c.b16 %v780, %v779
          %v808 = vpack.c.b16 %v782, %v781
          %v809 = vpack.c.b16 %v784, %v783
          %v810 = vpack.c.b16 %v786, %v785
          %v811 = vpack.c.b16 %v788, %v787
          %v812 = vpack.c.b16 %v790, %v789
          %v813 = vpack.c.b16 %v792, %v791
          %v814 = vpack.c.b16 %v794, %v793
          %v815 = vpack.c.b16 %v796, %v795
          %v816 = vpack.c.b16 %v798, %v797
          %v817 = vpack.c.b16 %v800, %v799
          %v818 = vpack.c.b16 %v802, %v801
          %835 = vmatprep.subr.bf16.mxu0 0
          %836 = vmatpush1.bf16.msra.mxu0 %v803
          %837 = vmatprep.subr.bf16.mxu0 0
          %838 = vmatpush1.bf16.msra.mxu0 %v804
          %839 = vmatprep.subr.bf16.mxu0 0
          %840 = vmatpush1.bf16.msra.mxu0 %v805
          %841 = vmatprep.subr.bf16.mxu0 0
          %842 = vmatpush1.bf16.msra.mxu0 %v806
          %843 = vmatprep.subr.bf16.mxu0 0
          %844 = vmatpush1.bf16.msra.mxu0 %v807
          %845 = vmatprep.subr.bf16.mxu0 0
          %846 = vmatpush1.bf16.msra.mxu0 %v808
          %847 = vmatprep.subr.bf16.mxu0 0
          %848 = vmatpush1.bf16.msra.mxu0 %v809
          %849 = vmatprep.subr.bf16.mxu0 0
          %850 = vmatpush1.bf16.msra.mxu0 %v810
          %851 = vmatprep.subr.bf16.mxu0 0
          %852 = vmatpush1.bf16.msra.mxu0 %v811
          %853 = vmatprep.subr.bf16.mxu0 0
          %854 = vmatpush1.bf16.msra.mxu0 %v812
          %855 = vmatprep.subr.bf16.mxu0 0
          %856 = vmatpush1.bf16.msra.mxu0 %v813
          %857 = vmatprep.subr.bf16.mxu0 0
          %858 = vmatpush1.bf16.msra.mxu0 %v814
          %859 = vmatprep.subr.bf16.mxu0 0
          %860 = vmatpush1.bf16.msra.mxu0 %v815
          %861 = vmatprep.subr.bf16.mxu0 0
          %862 = vmatpush1.bf16.msra.mxu0 %v816
          %863 = vmatprep.subr.bf16.mxu0 0
          %864 = vmatpush1.bf16.msra.mxu0 %v817
          %865 = vmatprep.subr.bf16.mxu0 0
          %866 = vmatpush1.bf16.msra.mxu0 %v818
          %867 = vmatprep.mubr.bf16.mxu0 %v736
          %868 = vmatmul.mubr.bf16.gmra.mrb[0].mxu0 %v735
          %v869 = vpop.f32.mrb[0].mxu0
          %v870 = vadd.f32 %v730, %v869
          %v871 = vpop.f32.mrb[0].mxu0
          %v872 = vpop.f32.mrb[0].mxu0
          %v873 = vpop.f32.mrb[0].mxu0
          %874 = vdwg.mxu0
          %v875 = vpack.c.bf16 %v687, %v687
          %v876 = vld [vmem:[%s6] sm:$0xf]
          %v877 = vld [vmem:[%s6 + $0x4] sm:$0xf]
          %v878 = vld [vmem:[%s6 + $0x8] sm:$0xf]
          %v879 = vld [vmem:[%s6 + $0xc] sm:$0xf]
          %v880 = vld [vmem:[%s6 + $0x10] sm:$0xf]
          %v881 = vld [vmem:[%s6 + $0x14] sm:$0xf]
          %v882 = vld [vmem:[%s6 + $0x18] sm:$0xf]
          %v883 = vld [vmem:[%s6 + $0x1c] sm:$0xf]
          %v884 = vld [vmem:[%s6 + $0x20] sm:$0xf]
          %v885 = vld [vmem:[%s6 + $0x24] sm:$0xf]
          %v886 = vld [vmem:[%s6 + $0x28] sm:$0xf]
          %v887 = vld [vmem:[%s6 + $0x2c] sm:$0xf]
          %v888 = vld [vmem:[%s6 + $0x30] sm:$0xf]
          %v889 = vld [vmem:[%s6 + $0x34] sm:$0xf]
          %v890 = vld [vmem:[%s6 + $0x38] sm:$0xf]
          %v891 = vld [vmem:[%s6 + $0x3c] sm:$0xf]
          %v892 = vpack.c.bf16 %v870, %v870
          %v893 = vld [vmem:[%s7] sm:$0xf]
          %v894 = vld [vmem:[%s7 + $0x4] sm:$0xf]
          %v895 = vld [vmem:[%s7 + $0x8] sm:$0xf]
          %v896 = vld [vmem:[%s7 + $0xc] sm:$0xf]
          %v897 = vld [vmem:[%s7 + $0x10] sm:$0xf]
          %v898 = vld [vmem:[%s7 + $0x14] sm:$0xf]
          %v899 = vld [vmem:[%s7 + $0x18] sm:$0xf]
          %v900 = vld [vmem:[%s7 + $0x1c] sm:$0xf]
          %v901 = vld [vmem:[%s7 + $0x20] sm:$0xf]
          %v902 = vld [vmem:[%s7 + $0x24] sm:$0xf]
          %v903 = vld [vmem:[%s7 + $0x28] sm:$0xf]
          %v904 = vld [vmem:[%s7 + $0x2c] sm:$0xf]
          %v905 = vld [vmem:[%s7 + $0x30] sm:$0xf]
          %v906 = vld [vmem:[%s7 + $0x34] sm:$0xf]
          %v907 = vld [vmem:[%s7 + $0x38] sm:$0xf]
          %v908 = vld [vmem:[%s7 + $0x3c] sm:$0xf]
          %v925 = vunpack.c.l.b16 %v893
          %v926 = vunpack.c.l.b16 %v894
          %v927 = vunpack.c.l.b16 %v895
          %v928 = vunpack.c.l.b16 %v896
          %v929 = vunpack.c.l.b16 %v897
          %v930 = vunpack.c.l.b16 %v898
          %v931 = vunpack.c.l.b16 %v899
          %v932 = vunpack.c.l.b16 %v900
          %v933 = vunpack.c.l.b16 %v901
          %v934 = vunpack.c.l.b16 %v902
          %v935 = vunpack.c.l.b16 %v903
          %v936 = vunpack.c.l.b16 %v904
          %v937 = vunpack.c.l.b16 %v905
          %v938 = vunpack.c.l.b16 %v906
          %v939 = vunpack.c.l.b16 %v907
          %v940 = vunpack.c.l.b16 %v908
          %v941 = vpack.c.b16 %v926, %v925
          %v942 = vpack.c.b16 %v928, %v927
          %v943 = vpack.c.b16 %v930, %v929
          %v944 = vpack.c.b16 %v932, %v931
          %v945 = vpack.c.b16 %v934, %v933
          %v946 = vpack.c.b16 %v936, %v935
          %v947 = vpack.c.b16 %v938, %v937
          %v948 = vpack.c.b16 %v940, %v939
          %957 = vmatprep.subr.bf16.mxu0 0
          %958 = vmatpush1.bf16.msra.mxu0 %v941
          %959 = vmatprep.subr.bf16.mxu0 0
          %960 = vmatpush1.bf16.msra.mxu0 %v942
          %961 = vmatprep.subr.bf16.mxu0 0
          %962 = vmatpush1.bf16.msra.mxu0 %v943
          %963 = vmatprep.subr.bf16.mxu0 0
          %964 = vmatpush1.bf16.msra.mxu0 %v944
          %965 = vmatprep.subr.bf16.mxu0 0
          %966 = vmatpush1.bf16.msra.mxu0 %v945
          %967 = vmatprep.subr.bf16.mxu0 0
          %968 = vmatpush1.bf16.msra.mxu0 %v946
          %969 = vmatprep.subr.bf16.mxu0 0
          %970 = vmatpush1.bf16.msra.mxu0 %v947
          %971 = vmatprep.subr.bf16.mxu0 0
          %972 = vmatpush1.bf16.msra.mxu0 %v948
          %973 = vmatprep.subr.bf16.mxu0 0
          %974 = vmatpush1.bf16.msra.mxu0 0
          %975 = vmatprep.subr.bf16.mxu0 0
          %976 = vmatpush1.bf16.msra.mxu0 0
          %977 = vmatprep.subr.bf16.mxu0 0
          %978 = vmatpush1.bf16.msra.mxu0 0
          %979 = vmatprep.subr.bf16.mxu0 0
          %980 = vmatpush1.bf16.msra.mxu0 0
          %981 = vmatprep.subr.bf16.mxu0 0
          %982 = vmatpush1.bf16.msra.mxu0 0
          %983 = vmatprep.subr.bf16.mxu0 0
          %984 = vmatpush1.bf16.msra.mxu0 0
          %985 = vmatprep.subr.bf16.mxu0 0
          %986 = vmatpush1.bf16.msra.mxu0 0
          %987 = vmatprep.subr.bf16.mxu0 0
          %988 = vmatpush1.bf16.msra.mxu0 0
          %989 = vmatprep.mubr.bf16.mxu0 0
          %990 = vmatmul.mubr.bf16.gmra.mrb[0].mxu0 %v892
          %v991 = vpop.f32.mrb[0].mxu0
          %v992 = vadd.f32 0.0, %v991
          %v993 = vpop.f32.mrb[0].mxu0
          %v994 = vpop.f32.mrb[0].mxu0
          %v995 = vpop.f32.mrb[0].mxu0
          %996 = vdwg.mxu0
          %v1013 = vunpack.c.l.b16 %v876
          %v1014 = vunpack.c.l.b16 %v877
          %v1015 = vunpack.c.l.b16 %v878
          %v1016 = vunpack.c.l.b16 %v879
          %v1017 = vunpack.c.l.b16 %v880
          %v1018 = vunpack.c.l.b16 %v881
          %v1019 = vunpack.c.l.b16 %v882
          %v1020 = vunpack.c.l.b16 %v883
          %v1021 = vunpack.c.l.b16 %v884
          %v1022 = vunpack.c.l.b16 %v885
          %v1023 = vunpack.c.l.b16 %v886
          %v1024 = vunpack.c.l.b16 %v887
          %v1025 = vunpack.c.l.b16 %v888
          %v1026 = vunpack.c.l.b16 %v889
          %v1027 = vunpack.c.l.b16 %v890
          %v1028 = vunpack.c.l.b16 %v891
          %v1029 = vpack.c.b16 %v1014, %v1013
          %v1030 = vpack.c.b16 %v1016, %v1015
          %v1031 = vpack.c.b16 %v1018, %v1017
          %v1032 = vpack.c.b16 %v1020, %v1019
          %v1033 = vpack.c.b16 %v1022, %v1021
          %v1034 = vpack.c.b16 %v1024, %v1023
          %v1035 = vpack.c.b16 %v1026, %v1025
          %v1036 = vpack.c.b16 %v1028, %v1027
          %1045 = vmatprep.subr.bf16.mxu0 0
          %1046 = vmatpush1.bf16.msra.mxu0 %v1029
          %1047 = vmatprep.subr.bf16.mxu0 0
          %1048 = vmatpush1.bf16.msra.mxu0 %v1030
          %1049 = vmatprep.subr.bf16.mxu0 0
          %1050 = vmatpush1.bf16.msra.mxu0 %v1031
          %1051 = vmatprep.subr.bf16.mxu0 0
          %1052 = vmatpush1.bf16.msra.mxu0 %v1032
          %1053 = vmatprep.subr.bf16.mxu0 0
          %1054 = vmatpush1.bf16.msra.mxu0 %v1033
          %1055 = vmatprep.subr.bf16.mxu0 0
          %1056 = vmatpush1.bf16.msra.mxu0 %v1034
          %1057 = vmatprep.subr.bf16.mxu0 0
          %1058 = vmatpush1.bf16.msra.mxu0 %v1035
          %1059 = vmatprep.subr.bf16.mxu0 0
          %1060 = vmatpush1.bf16.msra.mxu0 %v1036
          %1061 = vmatprep.subr.bf16.mxu0 0
          %1062 = vmatpush1.bf16.msra.mxu0 0
          %1063 = vmatprep.subr.bf16.mxu0 0
          %1064 = vmatpush1.bf16.msra.mxu0 0
          %1065 = vmatprep.subr.bf16.mxu0 0
          %1066 = vmatpush1.bf16.msra.mxu0 0
          %1067 = vmatprep.subr.bf16.mxu0 0
          %1068 = vmatpush1.bf16.msra.mxu0 0
          %1069 = vmatprep.subr.bf16.mxu0 0
          %1070 = vmatpush1.bf16.msra.mxu0 0
          %1071 = vmatprep.subr.bf16.mxu0 0
          %1072 = vmatpush1.bf16.msra.mxu0 0
          %1073 = vmatprep.subr.bf16.mxu0 0
          %1074 = vmatpush1.bf16.msra.mxu0 0
          %1075 = vmatprep.subr.bf16.mxu0 0
          %1076 = vmatpush1.bf16.msra.mxu0 0
          %1077 = vmatprep.mubr.bf16.mxu0 0
          %1078 = vmatmul.mubr.bf16.gmra.mrb[0].mxu0 %v875
          %v1079 = vpop.f32.mrb[0].mxu0
          %v1080 = vadd.f32 %v992, %v1079
          %v1081 = vpop.f32.mrb[0].mxu0
          %v1082 = vpop.f32.mrb[0].mxu0
          %v1083 = vpop.f32.mrb[0].mxu0
          %1084 = vdwg.mxu0
          %v1085 = vld [vmem:[%s8] sm:$0x1]
          %v1087 = vlaneseq
          %v1088 = vshrl.u32 %v1087, 7
          %v1089 = vsub.s32 0, %v1088
          %v1090 = vrot.slane %v1085, %v1089
          %v1092 = vadd.f32 %v1080, %v1090
          %v1093 = vmax.f32 %v1092, 0.0
          %v1094 = vpack.c.bf16 %v1093, %v1093
          %v1095 = vld [vmem:[%s9] sm:$0xf]
          %v1096 = vld [vmem:[%s9 + $0x4] sm:$0xf]
          %v1097 = vld [vmem:[%s9 + $0x8] sm:$0xf]
          %v1098 = vld [vmem:[%s9 + $0xc] sm:$0xf]
          %v1099 = vld [vmem:[%s9 + $0x10] sm:$0xf]
          %v1100 = vld [vmem:[%s9 + $0x14] sm:$0xf]
          %v1101 = vld [vmem:[%s9 + $0x18] sm:$0xf]
          %v1102 = vld [vmem:[%s9 + $0x1c] sm:$0xf]
          %v1103 = vld [vmem:[%s9 + $0x20] sm:$0xf]
          %v1104 = vld [vmem:[%s9 + $0x24] sm:$0xf]
          %v1105 = vld [vmem:[%s9 + $0x28] sm:$0xf]
          %v1106 = vld [vmem:[%s9 + $0x2c] sm:$0xf]
          %v1107 = vld [vmem:[%s9 + $0x30] sm:$0xf]
          %v1108 = vld [vmem:[%s9 + $0x34] sm:$0xf]
          %v1109 = vld [vmem:[%s9 + $0x38] sm:$0xf]
          %v1110 = vld [vmem:[%s9 + $0x3c] sm:$0xf]
          %v1111 = vld [vmem:[%s10] sm:$0x1]
          %v1113 = vlaneseq
          %v1114 = vshrl.u32 %v1113, 7
          %v1115 = vsub.s32 0, %v1114
          %v1116 = vrot.slane %v1111, %v1115
          %v1134 = vunpack.c.l.b16 %v1095
          %v1135 = vunpack.c.l.b16 %v1096
          %v1136 = vunpack.c.l.b16 %v1097
          %v1137 = vunpack.c.l.b16 %v1098
          %v1138 = vunpack.c.l.b16 %v1099
          %v1139 = vunpack.c.l.b16 %v1100
          %v1140 = vunpack.c.l.b16 %v1101
          %v1141 = vunpack.c.l.b16 %v1102
          %v1142 = vunpack.c.l.b16 %v1103
          %v1143 = vunpack.c.l.b16 %v1104
          %v1144 = vunpack.c.l.b16 %v1105
          %v1145 = vunpack.c.l.b16 %v1106
          %v1146 = vunpack.c.l.b16 %v1107
          %v1147 = vunpack.c.l.b16 %v1108
          %v1148 = vunpack.c.l.b16 %v1109
          %v1149 = vunpack.c.l.b16 %v1110
          %v1150 = vpack.c.b16 %v1135, %v1134
          %v1151 = vpack.c.b16 %v1137, %v1136
          %v1152 = vpack.c.b16 %v1139, %v1138
          %v1153 = vpack.c.b16 %v1141, %v1140
          %v1154 = vpack.c.b16 %v1143, %v1142
          %v1155 = vpack.c.b16 %v1145, %v1144
          %v1156 = vpack.c.b16 %v1147, %v1146
          %v1157 = vpack.c.b16 %v1149, %v1148
          %1166 = vmatprep.subr.bf16.mxu0 0
          %1167 = vmatpush1.bf16.msra.mxu0 %v1150
          %1168 = vmatprep.subr.bf16.mxu0 0
          %1169 = vmatpush1.bf16.msra.mxu0 %v1151
          %1170 = vmatprep.subr.bf16.mxu0 0
          %1171 = vmatpush1.bf16.msra.mxu0 %v1152
          %1172 = vmatprep.subr.bf16.mxu0 0
          %1173 = vmatpush1.bf16.msra.mxu0 %v1153
          %1174 = vmatprep.subr.bf16.mxu0 0
          %1175 = vmatpush1.bf16.msra.mxu0 %v1154
          %1176 = vmatprep.subr.bf16.mxu0 0
          %1177 = vmatpush1.bf16.msra.mxu0 %v1155
          %1178 = vmatprep.subr.bf16.mxu0 0
          %1179 = vmatpush1.bf16.msra.mxu0 %v1156
          %1180 = vmatprep.subr.bf16.mxu0 0
          %1181 = vmatpush1.bf16.msra.mxu0 %v1157
          %1182 = vmatprep.subr.bf16.mxu0 0
          %1183 = vmatpush1.bf16.msra.mxu0 0
          %1184 = vmatprep.subr.bf16.mxu0 0
          %1185 = vmatpush1.bf16.msra.mxu0 0
          %1186 = vmatprep.subr.bf16.mxu0 0
          %1187 = vmatpush1.bf16.msra.mxu0 0
          %1188 = vmatprep.subr.bf16.mxu0 0
          %1189 = vmatpush1.bf16.msra.mxu0 0
          %1190 = vmatprep.subr.bf16.mxu0 0
          %1191 = vmatpush1.bf16.msra.mxu0 0
          %1192 = vmatprep.subr.bf16.mxu0 0
          %1193 = vmatpush1.bf16.msra.mxu0 0
          %1194 = vmatprep.subr.bf16.mxu0 0
          %1195 = vmatpush1.bf16.msra.mxu0 0
          %1196 = vmatprep.subr.bf16.mxu0 0
          %1197 = vmatpush1.bf16.msra.mxu0 0
          %1198 = vmatprep.mubr.bf16.mxu0 0
          %1199 = vmatmul.mubr.bf16.gmra.mrb[0].mxu0 %v1094
          %v1200 = vpop.f32.mrb[0].mxu0
          %v1201 = vadd.f32 %v1116, %v1200
          %v1202 = vpop.f32.mrb[0].mxu0
          %v1203 = vpop.f32.mrb[0].mxu0
          %v1204 = vpop.f32.mrb[0].mxu0
          %1205 = vdwg.mxu0
          %v1206 = vmax.f32 %v1201, 0.0
          %v1207 = vpack.c.bf16 %v1206, %v1206
          %1208 = vst [vmem:[#allocation2] sm:$0xf] %v1207
        $region99: #{mlp_forward.1} parent=90 // pred_fallthru
          _
        %v1209 = vld [vmem:[#allocation2] sm:$0xf]
        %v1210 = vld [vmem:[%s520] sm:$0xff]
        %v1211 = vld [vmem:[%s520 + $0x8] sm:$0xff]
        %v1212 = vld [vmem:[%s520 + $0x10] sm:$0xff]
        %v1213 = vld [vmem:[%s520 + $0x18] sm:$0xff]
        %v1214 = vld [vmem:[%s520 + $0x20] sm:$0xff]
        %v1215 = vld [vmem:[%s520 + $0x28] sm:$0xff]
        %v1216 = vld [vmem:[%s520 + $0x30] sm:$0xff]
        %v1217 = vld [vmem:[%s520 + $0x38] sm:$0xff]
        %v1218 = vld [vmem:[%s520 + $0x40] sm:$0xff]
        %v1219 = vld [vmem:[%s520 + $0x48] sm:$0xff]
        %v1220 = vld [vmem:[%s520 + $0x50] sm:$0xff]
        %v1221 = vld [vmem:[%s520 + $0x58] sm:$0xff]
        %v1222 = vld [vmem:[%s520 + $0x60] sm:$0xff]
        %v1223 = vld [vmem:[%s520 + $0x68] sm:$0xff]
        %v1224 = vld [vmem:[%s520 + $0x70] sm:$0xff]
        %v1225 = vld [vmem:[%s520 + $0x78] sm:$0xff]
        %v1226 = vld [vmem:[%s520 + $0x80] sm:$0xff]
        %v1227 = vld [vmem:[%s520 + $0x88] sm:$0xff]
        %v1228 = vld [vmem:[%s520 + $0x90] sm:$0xff]
        %v1229 = vld [vmem:[%s520 + $0x98] sm:$0xff]
        %v1230 = vld [vmem:[%s520 + $0xa0] sm:$0xff]
        %v1231 = vld [vmem:[%s520 + $0xa8] sm:$0xff]
        %v1232 = vld [vmem:[%s520 + $0xb0] sm:$0xff]
        %v1233 = vld [vmem:[%s520 + $0xb8] sm:$0xff]
        %v1234 = vld [vmem:[%s520 + $0xc0] sm:$0xff]
        %v1235 = vld [vmem:[%s520 + $0xc8] sm:$0xff]
        %v1236 = vld [vmem:[%s520 + $0xd0] sm:$0xff]
        %v1237 = vld [vmem:[%s520 + $0xd8] sm:$0xff]
        %v1238 = vld [vmem:[%s520 + $0xe0] sm:$0xff]
        %v1239 = vld [vmem:[%s520 + $0xe8] sm:$0xff]
        %v1240 = vld [vmem:[%s520 + $0xf0] sm:$0xff]
        %v1241 = vld [vmem:[%s520 + $0xf8] sm:$0xff]
        %v1242 = vld [vmem:[%s591] sm:$0xf]
        %v1244 = vlaneseq
        %v1245 = vshrl.u32 %v1244, 7
        %v1246 = vsub.s32 0, %v1245
        %v1247 = vrot.slane %v1242, %v1246
        %v1248 = vlaneseq
        %v1249 = vshrl.u32 %v1248, 7
        %v1250 = vsub.s32 1, %v1249
        %v1251 = vrot.slane %v1242, %v1250
        %v1252 = vlaneseq
        %v1253 = vshrl.u32 %v1252, 7
        %v1254 = vsub.s32 2, %v1253
        %v1255 = vrot.slane %v1242, %v1254
        %v1256 = vlaneseq
        %v1257 = vshrl.u32 %v1256, 7
        %v1258 = vsub.s32 3, %v1257
        %v1259 = vrot.slane %v1242, %v1258
        %v1296 = vunpack.c.l.b16 %v1210
        %v1297 = vunpack.c.h.b16 %v1210
        %v1298 = vunpack.c.l.b16 %v1211
        %v1299 = vunpack.c.h.b16 %v1211
        %v1300 = vunpack.c.l.b16 %v1212
        %v1301 = vunpack.c.h.b16 %v1212
        %v1302 = vunpack.c.l.b16 %v1213
        %v1303 = vunpack.c.h.b16 %v1213
        %v1304 = vunpack.c.l.b16 %v1214
        %v1305 = vunpack.c.h.b16 %v1214
        %v1306 = vunpack.c.l.b16 %v1215
        %v1307 = vunpack.c.h.b16 %v1215
        %v1308 = vunpack.c.l.b16 %v1216
        %v1309 = vunpack.c.h.b16 %v1216
        %v1310 = vunpack.c.l.b16 %v1217
        %v1311 = vunpack.c.h.b16 %v1217
        %v1312 = vunpack.c.l.b16 %v1218
        %v1313 = vunpack.c.h.b16 %v1218
        %v1314 = vunpack.c.l.b16 %v1219
        %v1315 = vunpack.c.h.b16 %v1219
        %v1316 = vunpack.c.l.b16 %v1220
        %v1317 = vunpack.c.h.b16 %v1220
        %v1318 = vunpack.c.l.b16 %v1221
        %v1319 = vunpack.c.h.b16 %v1221
        %v1320 = vunpack.c.l.b16 %v1222
        %v1321 = vunpack.c.h.b16 %v1222
        %v1322 = vunpack.c.l.b16 %v1223
        %v1323 = vunpack.c.h.b16 %v1223
        %v1324 = vunpack.c.l.b16 %v1224
        %v1325 = vunpack.c.h.b16 %v1224
        %v1326 = vunpack.c.l.b16 %v1225
        %v1327 = vunpack.c.h.b16 %v1225
        %v1328 = vunpack.c.l.b16 %v1226
        %v1329 = vunpack.c.h.b16 %v1226
        %v1330 = vunpack.c.l.b16 %v1227
        %v1331 = vunpack.c.h.b16 %v1227
        %v1332 = vunpack.c.l.b16 %v1228
        %v1333 = vunpack.c.h.b16 %v1228
        %v1334 = vunpack.c.l.b16 %v1229
        %v1335 = vunpack.c.h.b16 %v1229
        %v1336 = vunpack.c.l.b16 %v1230
        %v1337 = vunpack.c.h.b16 %v1230
        %v1338 = vunpack.c.l.b16 %v1231
        %v1339 = vunpack.c.h.b16 %v1231
        %v1340 = vunpack.c.l.b16 %v1232
        %v1341 = vunpack.c.h.b16 %v1232
        %v1342 = vunpack.c.l.b16 %v1233
        %v1343 = vunpack.c.h.b16 %v1233
        %v1344 = vunpack.c.l.b16 %v1234
        %v1345 = vunpack.c.h.b16 %v1234
        %v1346 = vunpack.c.l.b16 %v1235
        %v1347 = vunpack.c.h.b16 %v1235
        %v1348 = vunpack.c.l.b16 %v1236
        %v1349 = vunpack.c.h.b16 %v1236
        %v1350 = vunpack.c.l.b16 %v1237
        %v1351 = vunpack.c.h.b16 %v1237
        %v1352 = vunpack.c.l.b16 %v1238
        %v1353 = vunpack.c.h.b16 %v1238
        %v1354 = vunpack.c.l.b16 %v1239
        %v1355 = vunpack.c.h.b16 %v1239
        %v1356 = vunpack.c.l.b16 %v1240
        %v1357 = vunpack.c.h.b16 %v1240
        %v1358 = vunpack.c.l.b16 %v1241
        %v1359 = vunpack.c.h.b16 %v1241
        %v1360 = vpack.c.b16 %v1300, %v1296
        %v1361 = vpack.c.b16 %v1301, %v1297
        %v1362 = vpack.c.b16 %v1302, %v1298
        %v1363 = vpack.c.b16 %v1303, %v1299
        %v1364 = vpack.c.b16 %v1308, %v1304
        %v1365 = vpack.c.b16 %v1309, %v1305
        %v1366 = vpack.c.b16 %v1310, %v1306
        %v1367 = vpack.c.b16 %v1311, %v1307
        %v1368 = vpack.c.b16 %v1316, %v1312
        %v1369 = vpack.c.b16 %v1317, %v1313
        %v1370 = vpack.c.b16 %v1318, %v1314
        %v1371 = vpack.c.b16 %v1319, %v1315
        %v1372 = vpack.c.b16 %v1324, %v1320
        %v1373 = vpack.c.b16 %v1325, %v1321
        %v1374 = vpack.c.b16 %v1326, %v1322
        %v1375 = vpack.c.b16 %v1327, %v1323
        %v1376 = vpack.c.b16 %v1332, %v1328
        %v1377 = vpack.c.b16 %v1333, %v1329
        %v1378 = vpack.c.b16 %v1334, %v1330
        %v1379 = vpack.c.b16 %v1335, %v1331
        %v1380 = vpack.c.b16 %v1340, %v1336
        %v1381 = vpack.c.b16 %v1341, %v1337
        %v1382 = vpack.c.b16 %v1342, %v1338
        %v1383 = vpack.c.b16 %v1343, %v1339
        %v1384 = vpack.c.b16 %v1348, %v1344
        %v1385 = vpack.c.b16 %v1349, %v1345
        %v1386 = vpack.c.b16 %v1350, %v1346
        %v1387 = vpack.c.b16 %v1351, %v1347
        %v1388 = vpack.c.b16 %v1356, %v1352
        %v1389 = vpack.c.b16 %v1357, %v1353
        %v1390 = vpack.c.b16 %v1358, %v1354
        %v1391 = vpack.c.b16 %v1359, %v1355
        %1424 = vmatprep.subr.bf16.mxu0 %v1361
        %1425 = vmatpush1.bf16.msra.mxu0 %v1360
        %1426 = vmatprep.subr.bf16.mxu0 %v1365
        %1427 = vmatpush1.bf16.msra.mxu0 %v1364
        %1428 = vmatprep.subr.bf16.mxu0 %v1369
        %1429 = vmatpush1.bf16.msra.mxu0 %v1368
        %1430 = vmatprep.subr.bf16.mxu0 %v1373
        %1431 = vmatpush1.bf16.msra.mxu0 %v1372
        %1432 = vmatprep.subr.bf16.mxu0 %v1377
        %1433 = vmatpush1.bf16.msra.mxu0 %v1376
        %1434 = vmatprep.subr.bf16.mxu0 %v1381
        %1435 = vmatpush1.bf16.msra.mxu0 %v1380
        %1436 = vmatprep.subr.bf16.mxu0 %v1385
        %1437 = vmatpush1.bf16.msra.mxu0 %v1384
        %1438 = vmatprep.subr.bf16.mxu0 %v1389
        %1439 = vmatpush1.bf16.msra.mxu0 %v1388
        %1440 = vmatprep.subr.bf16.mxu0 0
        %1441 = vmatpush1.bf16.msra.mxu0 0
        %1442 = vmatprep.subr.bf16.mxu0 0
        %1443 = vmatpush1.bf16.msra.mxu0 0
        %1444 = vmatprep.subr.bf16.mxu0 0
        %1445 = vmatpush1.bf16.msra.mxu0 0
        %1446 = vmatprep.subr.bf16.mxu0 0
        %1447 = vmatpush1.bf16.msra.mxu0 0
        %1448 = vmatprep.subr.bf16.mxu0 0
        %1449 = vmatpush1.bf16.msra.mxu0 0
        %1450 = vmatprep.subr.bf16.mxu0 0
        %1451 = vmatpush1.bf16.msra.mxu0 0
        %1452 = vmatprep.subr.bf16.mxu0 0
        %1453 = vmatpush1.bf16.msra.mxu0 0
        %1454 = vmatprep.subr.bf16.mxu0 0
        %1455 = vmatpush1.bf16.msra.mxu0 0
        %1456 = vmatprep.mubr.bf16.mxu0 0
        %1457 = vmatmul.mubr.bf16.gmra.mrb[0].mxu0 %v1209
        %v1458 = vpop.f32.mrb[0].mxu0
        %v1459 = vadd.f32 %v1247, %v1458
        %v1460 = vpop.f32.mrb[0].mxu0
        %v1461 = vadd.f32 %v1251, %v1460
        %v1462 = vpop.f32.mrb[0].mxu0
        %v1463 = vpop.f32.mrb[0].mxu0
        %1464 = vdwg.mxu0
        %1465 = vmatprep.subr.bf16.mxu0 %v1363
        %1466 = vmatpush1.bf16.msra.mxu0 %v1362
        %1467 = vmatprep.subr.bf16.mxu0 %v1367
        %1468 = vmatpush1.bf16.msra.mxu0 %v1366
        %1469 = vmatprep.subr.bf16.mxu0 %v1371
        %1470 = vmatpush1.bf16.msra.mxu0 %v1370
        %1471 = vmatprep.subr.bf16.mxu0 %v1375
        %1472 = vmatpush1.bf16.msra.mxu0 %v1374
        %1473 = vmatprep.subr.bf16.mxu0 %v1379
        %1474 = vmatpush1.bf16.msra.mxu0 %v1378
        %1475 = vmatprep.subr.bf16.mxu0 %v1383
        %1476 = vmatpush1.bf16.msra.mxu0 %v1382
        %1477 = vmatprep.subr.bf16.mxu0 %v1387
        %1478 = vmatpush1.bf16.msra.mxu0 %v1386
        %1479 = vmatprep.subr.bf16.mxu0 %v1391
        %1480 = vmatpush1.bf16.msra.mxu0 %v1390
        %1481 = vmatprep.subr.bf16.mxu0 0
        %1482 = vmatpush1.bf16.msra.mxu0 0
        %1483 = vmatprep.subr.bf16.mxu0 0
        %1484 = vmatpush1.bf16.msra.mxu0 0
        %1485 = vmatprep.subr.bf16.mxu0 0
        %1486 = vmatpush1.bf16.msra.mxu0 0
        %1487 = vmatprep.subr.bf16.mxu0 0
        %1488 = vmatpush1.bf16.msra.mxu0 0
        %1489 = vmatprep.subr.bf16.mxu0 0
        %1490 = vmatpush1.bf16.msra.mxu0 0
        %1491 = vmatprep.subr.bf16.mxu0 0
        %1492 = vmatpush1.bf16.msra.mxu0 0
        %1493 = vmatprep.subr.bf16.mxu0 0
        %1494 = vmatpush1.bf16.msra.mxu0 0
        %1495 = vmatprep.subr.bf16.mxu0 0
        %1496 = vmatpush1.bf16.msra.mxu0 0
        %1497 = vmatprep.mubr.bf16.mxu0 0
        %1498 = vmatmul.mubr.bf16.gmra.mrb[0].mxu0 %v1209
        %v1499 = vpop.f32.mrb[0].mxu0
        %v1500 = vadd.f32 %v1255, %v1499
        %v1501 = vpop.f32.mrb[0].mxu0
        %v1502 = vadd.f32 %v1259, %v1501
        %v1503 = vpop.f32.mrb[0].mxu0
        %v1504 = vpop.f32.mrb[0].mxu0
        %1505 = vdwg.mxu0
        %1506 = vst [vmem:[%s601] sm:$0xff] %v1459
        %1507 = vst [vmem:[%s601 + $0x8] sm:$0xff] %v1461
        %1508 = vst [vmem:[%s601 + $0x10] sm:$0xff] %v1500
        %1509 = vst [vmem:[%s601 + $0x18] sm:$0xff] %v1502
        %s1510 = smul.u32 4, %s29
        %p1511 = scmp.lt.s32.totalorder %s28, 0
        %s1512 = scalar_select %p1511, %s28, 0
        %p1513 = scmp.lt.s32.totalorder %s1510, 15
        %s1514 = scalar_select %p1513, %s1510, 15
        %s1515 = smul.addr %s1512, 16
        %s1516 = sadd.s32 %s1514, %s1515
        %s1517 = smul.addr %s1516, 8
        %s1518 = scalar_lea.vmem %s13, %s1517
        // Predicated region
        $region100: #{mlp_forward.1} parent=90 // pred_check
          %p1519 = pneg %p349
        $region101: #{mlp_forward.1} parent=90 // pred_check_branch
          %1521 = sbr.rel (%p1519) target = $region103
        $region102: #{mlp_forward.1} parent=90 // pred_region
          %s1522 = smul.u32 4, %s29
        $region103: #{mlp_forward.1} parent=90 // pred_fallthru
          _
      $region91: #{mlp_forward.1} parent=5 // pred_fallthru
        _
      %p1523 = scmp.le.s32.totalorder 2, %s19
      // Predicated region
      $region104: #{mlp_forward.1} parent=5 // pred_check
        %p1524 = pneg %p1523
      $region105: #{mlp_forward.1} parent=5 // pred_check_branch
        %1526 = sbr.rel (%p1524) target = $region107
      $region106: #{mlp_forward.1} parent=5 // pred_region
        %s1527 = ssub.s32 %s19, 2
        // Predicated region
        $region108: #{mlp_forward.1} parent=106 // pred_check
          %p1528 = pneg %p355
        $region109: #{mlp_forward.1} parent=106 // pred_check_branch
          %1530 = sbr.rel (%p1528) target = $region111
        $region110: #{mlp_forward.1} parent=106 // pred_region
          %s1531 = smul.u32 4, %s31
          %p1532 = scmp.lt.s32.totalorder %s30, 0
          %s1533 = scalar_select %p1532, %s30, 0
          %p1534 = scmp.lt.s32.totalorder %s1531, 15
          %s1535 = scalar_select %p1534, %s1531, 15
          %s1536 = smul.addr %s1533, 16
          %s1537 = sadd.s32 %s1535, %s1536
          %s1538 = smul.addr %s1537, 8
          %s1539 = scalar_lea.vmem %s13, %s1538
        $region111: #{mlp_forward.1} parent=106 // pred_fallthru
          _
      $region107: #{mlp_forward.1} parent=5 // pred_fallthru
        _
    $region6: #{mlp_forward.1} parent=1 // loop_footer
      %s23 = sadd.s32 1, %s19
    $region7: #{mlp_forward.1} parent=1 // loop_footer_branch
      %18 = sbr.rel target = $region3
    $region8: #{mlp_forward.1} parent=1 // loop_exit
      _

</llo_original>
